<compile_context>
chip_gen: v6e
topology: v6e:2x2x1
jax: 0.10.0
libtpu: 0.0.40
codegen_flags: <defaults>
</compile_context>

<pallas_src>
import jax
import jax.numpy as jnp
from jax.experimental import pallas as pl
from jax.experimental.pallas import tpu as pltpu

EPS = 1e-3


def conv_bn_kernel(x_ref, w_ref, gb_ref, o_ref):
    # 1x1 conv == one MXU matmul in (Cout, M) layout with f32 accumulation.
    #   w_ref: (Cout, Cin) f32, x_ref: (Cin, M) f32  ->  y: (Cout, M) f32
    y = jnp.dot(w_ref[...], x_ref[...], preferred_element_type=jnp.float32)

    # BatchNorm2d (training mode): per-output-channel (row) statistics over all
    # N*H*W columns, computed in ONE streaming pass (sum + sum of squares).
    inv_m = 1.0 / y.shape[1]
    s1 = jnp.sum(y, axis=1, keepdims=True)        # (Cout, 1)
    s2 = jnp.sum(y * y, axis=1, keepdims=True)    # (Cout, 1)
    mean = s1 * inv_m
    # Biased variance; guard against tiny negative values from cancellation.
    var = jnp.maximum(s2 * inv_m - mean * mean, 0.0)

    gb = gb_ref[...]                              # (Cout, 2): [:,0]=gamma [:,1]=beta
    gamma = gb[:, 0:1]
    beta = gb[:, 1:2]

    scale = jax.lax.rsqrt(var + EPS) * gamma      # (Cout, 1)
    shift = beta - mean * scale                   # (Cout, 1)

    # Single normalize pass over y: out = (y - mean) * inv_std * gamma + beta
    o_ref[...] = y * scale + shift


@jax.jit
def conv2d_batchnorm(x_nchw, w2d, gb):
    """x_nchw: (N, Cin, H, W) f32   w2d: (Cout, Cin) f32   gb: (Cout, 2) f32."""
    n, cin, h, w = x_nchw.shape
    cout = w2d.shape[0]
    m = n * h * w

    # NCHW -> (Cin, N*H*W).  For N == 1 (the module's shape) the transpose is a
    # no-op that XLA elides, so this is a free reshape: channels stay on the
    # sublane axis, the spatial axis lands on lanes.
    x2d = jnp.transpose(x_nchw.reshape(n, cin, h * w), (1, 0, 2)).reshape(cin, m)

    out2d = pl.pallas_call(
        conv_bn_kernel,
        out_shape=jax.ShapeDtypeStruct((cout, m), jnp.float32),
        grid=(1,),
        in_specs=[
            pl.BlockSpec((cin, m), lambda i: (0, 0)),       # X   (Cin, M)
            pl.BlockSpec((cout, cin), lambda i: (0, 0)),    # W   (Cout, Cin)
            pl.BlockSpec((cout, 2), lambda i: (0, 0)),      # [gamma|beta]
        ],
        out_specs=pl.BlockSpec((cout, m), lambda i: (0, 0)),
        compiler_params=pltpu.CompilerParams(
            dimension_semantics=("arbitrary",)
        ),
    )(x2d, w2d, gb)

    # (Cout, N*H*W) -> NCHW; again a free reshape for N == 1.
    return jnp.transpose(out2d.reshape(cout, n, h, w), (1, 0, 2, 3))


def prepare_params(weight, gamma, beta):
    """One-time (eager, outside jit) parameter prep: no per-call convert HLOs."""
    cout, cin = weight.shape[0], weight.shape[1]
    w2d = jnp.asarray(weight.reshape(cout, cin), dtype=jnp.float32)   # (Cout, Cin)
    gb = jnp.stack(
        [jnp.asarray(gamma, jnp.float32), jnp.asarray(beta, jnp.float32)], axis=1
    )                                                                 # (Cout, 2)
    return w2d, gb


def reference(x_nchw, weight, gamma, beta):
    """Pure-JAX f32 reference of conv1x1 + training-mode BatchNorm2d."""
    n, cin, h, w = x_nchw.shape
    cout = weight.shape[0]
    w2d = weight.reshape(cout, cin)
    y = jnp.einsum("nchw,oc->nohw", x_nchw, w2d,
                   precision=jax.lax.Precision.HIGHEST)
    mean = jnp.mean(y, axis=(0, 2, 3), keepdims=True)
    var = jnp.mean((y - mean) ** 2, axis=(0, 2, 3), keepdims=True)
    return (y - mean) * jax.lax.rsqrt(var + EPS) * gamma.reshape(1, cout, 1, 1) \
        + beta.reshape(1, cout, 1, 1)


if __name__ == "__main__":
    key = jax.random.PRNGKey(0)
    kx, kw, kg, kb = jax.random.split(key, 4)

    # Shapes consistent with the module's forward: (1, 864, 14, 14) -> (1, 144, 14, 14)
    N, CIN, H, W = 1, 864, 14, 14
    COUT = 144

    x = jax.random.normal(kx, (N, CIN, H, W), dtype=jnp.float32)
    weight = jax.random.normal(kw, (COUT, CIN, 1, 1), dtype=jnp.float32) * 0.02
    gamma = 1.0 + 0.1 * jax.random.normal(kg, (COUT,), dtype=jnp.float32)
    beta = 0.1 * jax.random.normal(kb, (COUT,), dtype=jnp.float32)

    # Params are baked once, outside the per-call jit.
    w2d, gb = prepare_params(weight, gamma, beta)

    out = conv2d_batchnorm(x, w2d, gb)
    jax.block_until_ready(out)

    ref = reference(x, weight, gamma, beta)
    assert out.shape == (N, COUT, H, W)
    # Tolerance sized for the MXU's default (bf16-class) precision over a
    # K = 864 contraction vs. the f32/HIGHEST reference.
    assert jnp.allclose(out, ref, atol=2e-2, rtol=2e-2), \
        float(jnp.max(jnp.abs(out - ref)))

    print("KERNEL_OK")
</pallas_src>

<mosaic_0001>
module attributes {stable_mosaic.version = 11 : i64} {
  func.func @conv_bn_kernel(%arg0: i32, %arg1: memref<864x196xf32, #tpu.memory_space<vmem>>, %arg2: memref<144x864xf32, #tpu.memory_space<vmem>>, %arg3: memref<144x2xf32, #tpu.memory_space<vmem>>, %arg4: memref<144x196xf32, #tpu.memory_space<vmem>>) attributes {dimension_semantics = [#tpu.dimension_semantics<arbitrary>], iteration_bounds = array<i64: 1>, scalar_prefetch = 0 : i64, scratch_operands = 0 : i64, tpu.core_type = #tpu.core_type<tc>, window_params = [{pipeline_mode = #tpu.pipeline_mode<synchronous>, transform_indices = @transform_0, window_bounds = array<i64: 864, 196>}, {pipeline_mode = #tpu.pipeline_mode<synchronous>, transform_indices = @transform_1, window_bounds = array<i64: 144, 864>}, {pipeline_mode = #tpu.pipeline_mode<synchronous>, transform_indices = @transform_2, window_bounds = array<i64: 144, 2>}, {pipeline_mode = #tpu.pipeline_mode<synchronous>, transform_indices = @transform_3, window_bounds = array<i64: 144, 196>}]} {
    %c0 = arith.constant 0 : index
    %c0_0 = arith.constant 0 : index
    %0 = vector.load %arg2[%c0, %c0_0] : memref<144x864xf32, #tpu.memory_space<vmem>>, vector<144x864xf32>
    %c0_1 = arith.constant 0 : index
    %c0_2 = arith.constant 0 : index
    %1 = vector.load %arg1[%c0_1, %c0_2] : memref<864x196xf32, #tpu.memory_space<vmem>>, vector<864x196xf32>
    %cst = arith.constant dense<0.000000e+00> : vector<144x196xf32>
    %2 = tpu.matmul %0, %1, %cst {dimension_numbers = #tpu.dot_dimension_numbers<[1], [0], [0], [1], [0, 0, 1, 1], [], []>} : vector<144x864xf32>, vector<864x196xf32>, vector<144x196xf32> -> vector<144x196xf32>
    %cst_3 = arith.constant dense<0.000000e+00> : vector<144xf32>
    %3 = vector.multi_reduction <add>, %2, %cst_3 [1] : vector<144x196xf32> to vector<144xf32>
    %4 = vector.shape_cast %3 : vector<144xf32> to vector<144x1xf32>
    %5 = arith.mulf %2, %2 : vector<144x196xf32>
    %cst_4 = arith.constant dense<0.000000e+00> : vector<144xf32>
    %6 = vector.multi_reduction <add>, %5, %cst_4 [1] : vector<144x196xf32> to vector<144xf32>
    %7 = vector.shape_cast %6 : vector<144xf32> to vector<144x1xf32>
    %cst_5 = arith.constant 0.00510204071 : f32
    %8 = vector.broadcast %cst_5 : f32 to vector<144x1xf32>
    %9 = arith.mulf %4, %8 : vector<144x1xf32>
    %cst_6 = arith.constant 0.00510204071 : f32
    %10 = vector.broadcast %cst_6 : f32 to vector<144x1xf32>
    %11 = arith.mulf %7, %10 : vector<144x1xf32>
    %12 = arith.mulf %9, %9 : vector<144x1xf32>
    %13 = arith.subf %11, %12 : vector<144x1xf32>
    %cst_7 = arith.constant 0.000000e+00 : f32
    %14 = vector.broadcast %cst_7 : f32 to vector<144x1xf32>
    %15 = arith.maximumf %13, %14 : vector<144x1xf32>
    %c0_8 = arith.constant 0 : index
    %c0_9 = arith.constant 0 : index
    %16 = vector.load %arg3[%c0_8, %c0_9] : memref<144x2xf32, #tpu.memory_space<vmem>>, vector<144x2xf32>
    %17 = vector.extract_strided_slice %16 {offsets = [0, 0], sizes = [144, 1], strides = [1, 1]} : vector<144x2xf32> to vector<144x1xf32>
    %18 = vector.extract_strided_slice %16 {offsets = [0, 1], sizes = [144, 1], strides = [1, 1]} : vector<144x2xf32> to vector<144x1xf32>
    %cst_10 = arith.constant 1.000000e-03 : f32
    %19 = vector.broadcast %cst_10 : f32 to vector<144x1xf32>
    %20 = arith.addf %15, %19 : vector<144x1xf32>
    %21 = math.rsqrt %20 : vector<144x1xf32>
    %22 = arith.mulf %21, %17 : vector<144x1xf32>
    %23 = arith.mulf %9, %22 : vector<144x1xf32>
    %24 = arith.subf %18, %23 : vector<144x1xf32>
    %25 = vector.broadcast %22 : vector<144x1xf32> to vector<144x196xf32>
    %26 = arith.mulf %2, %25 : vector<144x196xf32>
    %27 = vector.broadcast %24 : vector<144x1xf32> to vector<144x196xf32>
    %28 = arith.addf %26, %27 : vector<144x196xf32>
    %c0_11 = arith.constant 0 : index
    %c0_12 = arith.constant 0 : index
    %29 = vector.load %arg4[%c0_11, %c0_12] : memref<144x196xf32, #tpu.memory_space<vmem>>, vector<144x196xf32>
    tpu.vector_store %arg4[%c0_11, %c0_12], %28 {strides = array<i32>} : memref<144x196xf32, #tpu.memory_space<vmem>>, vector<144x196xf32>,
    return
  }
  func.func @transform_0(%arg0: i32) -> (i32, i32) {
    %c0_i32 = arith.constant 0 : i32
    %c0_i32_0 = arith.constant 0 : i32
    %c0_i32_1 = arith.constant 0 : i32
    return %c0_i32, %c0_i32_0 : i32, i32
  }
  func.func @transform_1(%arg0: i32) -> (i32, i32) {
    %c0_i32 = arith.constant 0 : i32
    %c0_i32_0 = arith.constant 0 : i32
    %c0_i32_1 = arith.constant 0 : i32
    return %c0_i32, %c0_i32_0 : i32, i32
  }
  func.func @transform_2(%arg0: i32) -> (i32, i32) {
    %c0_i32 = arith.constant 0 : i32
    %c0_i32_0 = arith.constant 0 : i32
    %c0_i32_1 = arith.constant 0 : i32
    return %c0_i32, %c0_i32_0 : i32, i32
  }
  func.func @transform_3(%arg0: i32) -> (i32, i32) {
    %c0_i32 = arith.constant 0 : i32
    %c0_i32_0 = arith.constant 0 : i32
    %c0_i32_1 = arith.constant 0 : i32
    return %c0_i32, %c0_i32_0 : i32, i32
  }
}

</mosaic_0001>

<llo_original>
// kernel: conv2d_batchnorm.1
$region0: #{conv2d_batchnorm.1}
  #allocation0 [shape = 'u32[]', space=smem, size = 0x4, offset = 0x4, fixed_abs, tag = 'smem constant byte address 0x4 - core index']
  #allocation1 [shape = 'u32[144,128]{1,0:T(1,128)}', space=vmem, size = 0x12000, scoped, tag = 'internal scratch']
  %s0 = inlined_call_operand.vmem [shape: f32[864,196], index: 0, kind: input, shape index: {}]
  %s1 = inlined_call_operand.vmem [shape: f32[144,864], index: 1, kind: input, shape index: {}]
  %s2 = inlined_call_operand.vmem [shape: f32[144,2], index: 2, kind: input, shape index: {}]
  %s3 = inlined_call_operand.vmem [shape: f32[144,196], index: 3, kind: output, shape index: {}]
  %s4 = sld [smem:[#allocation0]]
  $region22: #{conv2d_batchnorm.1} parent=0
    _
  %s6 = ssub.s32 1, %s4
  %s7 = scalar_select 0, %s6, %s4
  // Predicated region
  $region2: #{conv2d_batchnorm.1} parent=0 // pred_check
    _
  $region3: #{conv2d_batchnorm.1} parent=0 // pred_check_branch
    %9 = sbr.rel (0) target = $region5
  $region4: #{conv2d_batchnorm.1} parent=0 // pred_region
    _
  $region5: #{conv2d_batchnorm.1} parent=0 // pred_fallthru
    _
  // Predicated region
  $region6: #{conv2d_batchnorm.1} parent=0 // pred_check
    _
  $region7: #{conv2d_batchnorm.1} parent=0 // pred_check_branch
    %11 = sbr.rel (0) target = $region9
  $region8: #{conv2d_batchnorm.1} parent=0 // pred_region
    _
  $region9: #{conv2d_batchnorm.1} parent=0 // pred_fallthru
    _
  // Predicated region
  $region10: #{conv2d_batchnorm.1} parent=0 // pred_check
    _
  $region11: #{conv2d_batchnorm.1} parent=0 // pred_check_branch
    %13 = sbr.rel (0) target = $region13
  $region12: #{conv2d_batchnorm.1} parent=0 // pred_region
    _
  $region13: #{conv2d_batchnorm.1} parent=0 // pred_fallthru
    _
  %v14 = vld [vmem:[%s1] sm:$0xff]
  %v15 = vld [vmem:[%s1 + $0x8] sm:$0xff]
  %v16 = vld [vmem:[%s1 + $0x10] sm:$0xff]
  %v17 = vld [vmem:[%s1 + $0x18] sm:$0xff]
  %v18 = vld [vmem:[%s1 + $0x20] sm:$0xff]
  %v19 = vld [vmem:[%s1 + $0x28] sm:$0xff]
  %v20 = vld [vmem:[%s1 + $0x30] sm:$0xff]
  %v21 = vld [vmem:[%s1 + $0x38] sm:$0xff]
  %v22 = vld [vmem:[%s1 + $0x40] sm:$0xff]
  %v23 = vld [vmem:[%s1 + $0x48] sm:$0xff]
  %v24 = vld [vmem:[%s1 + $0x50] sm:$0xff]
  %v25 = vld [vmem:[%s1 + $0x58] sm:$0xff]
  %v26 = vld [vmem:[%s1 + $0x60] sm:$0xff]
  %v27 = vld [vmem:[%s1 + $0x68] sm:$0xff]
  %v28 = vld [vmem:[%s1 + $0x70] sm:$0xff]
  %v29 = vld [vmem:[%s1 + $0x78] sm:$0xff]
  %v30 = vld [vmem:[%s1 + $0x80] sm:$0xff]
  %v31 = vld [vmem:[%s1 + $0x88] sm:$0xff]
  %v32 = vld [vmem:[%s1 + $0x90] sm:$0xff]
  %v33 = vld [vmem:[%s1 + $0x98] sm:$0xff]
  %v34 = vld [vmem:[%s1 + $0xa0] sm:$0xff]
  %v35 = vld [vmem:[%s1 + $0xa8] sm:$0xff]
  %v36 = vld [vmem:[%s1 + $0xb0] sm:$0xff]
  %v37 = vld [vmem:[%s1 + $0xb8] sm:$0xff]
  %v38 = vld [vmem:[%s1 + $0xc0] sm:$0xff]
  %v39 = vld [vmem:[%s1 + $0xc8] sm:$0xff]
  %v40 = vld [vmem:[%s1 + $0xd0] sm:$0xff]
  %v41 = vld [vmem:[%s1 + $0xd8] sm:$0xff]
  %v42 = vld [vmem:[%s1 + $0xe0] sm:$0xff]
  %v43 = vld [vmem:[%s1 + $0xe8] sm:$0xff]
  %v44 = vld [vmem:[%s1 + $0xf0] sm:$0xff]
  %v45 = vld [vmem:[%s1 + $0xf8] sm:$0xff]
  %v46 = vld [vmem:[%s1 + $0x100] sm:$0xff]
  %v47 = vld [vmem:[%s1 + $0x108] sm:$0xff]
  %v48 = vld [vmem:[%s1 + $0x110] sm:$0xff]
  %v49 = vld [vmem:[%s1 + $0x118] sm:$0xff]
  %v50 = vld [vmem:[%s1 + $0x120] sm:$0xff]
  %v51 = vld [vmem:[%s1 + $0x128] sm:$0xff]
  %v52 = vld [vmem:[%s1 + $0x130] sm:$0xff]
  %v53 = vld [vmem:[%s1 + $0x138] sm:$0xff]
  %v54 = vld [vmem:[%s1 + $0x140] sm:$0xff]
  %v55 = vld [vmem:[%s1 + $0x148] sm:$0xff]
  %v56 = vld [vmem:[%s1 + $0x150] sm:$0xff]
  %v57 = vld [vmem:[%s1 + $0x158] sm:$0xff]
  %v58 = vld [vmem:[%s1 + $0x160] sm:$0xff]
  %v59 = vld [vmem:[%s1 + $0x168] sm:$0xff]
  %v60 = vld [vmem:[%s1 + $0x170] sm:$0xff]
  %v61 = vld [vmem:[%s1 + $0x178] sm:$0xff]
  %v62 = vld [vmem:[%s1 + $0x180] sm:$0xff]
  %v63 = vld [vmem:[%s1 + $0x188] sm:$0xff]
  %v64 = vld [vmem:[%s1 + $0x190] sm:$0xff]
  %v65 = vld [vmem:[%s1 + $0x198] sm:$0xff]
  %v66 = vld [vmem:[%s1 + $0x1a0] sm:$0xff]
  %v67 = vld [vmem:[%s1 + $0x1a8] sm:$0xff]
  %v68 = vld [vmem:[%s1 + $0x1b0] sm:$0xff]
  %v69 = vld [vmem:[%s1 + $0x1b8] sm:$0xff]
  %v70 = vld [vmem:[%s1 + $0x1c0] sm:$0xff]
  %v71 = vld [vmem:[%s1 + $0x1c8] sm:$0xff]
  %v72 = vld [vmem:[%s1 + $0x1d0] sm:$0xff]
  %v73 = vld [vmem:[%s1 + $0x1d8] sm:$0xff]
  %v74 = vld [vmem:[%s1 + $0x1e0] sm:$0xff]
  %v75 = vld [vmem:[%s1 + $0x1e8] sm:$0xff]
  %v76 = vld [vmem:[%s1 + $0x1f0] sm:$0xff]
  %v77 = vld [vmem:[%s1 + $0x1f8] sm:$0xff]
  %v78 = vld [vmem:[%s1 + $0x200] sm:$0xff]
  %v79 = vld [vmem:[%s1 + $0x208] sm:$0xff]
  %v80 = vld [vmem:[%s1 + $0x210] sm:$0xff]
  %v81 = vld [vmem:[%s1 + $0x218] sm:$0xff]
  %v82 = vld [vmem:[%s1 + $0x220] sm:$0xff]
  %v83 = vld [vmem:[%s1 + $0x228] sm:$0xff]
  %v84 = vld [vmem:[%s1 + $0x230] sm:$0xff]
  %v85 = vld [vmem:[%s1 + $0x238] sm:$0xff]
  %v86 = vld [vmem:[%s1 + $0x240] sm:$0xff]
  %v87 = vld [vmem:[%s1 + $0x248] sm:$0xff]
  %v88 = vld [vmem:[%s1 + $0x250] sm:$0xff]
  %v89 = vld [vmem:[%s1 + $0x258] sm:$0xff]
  %v90 = vld [vmem:[%s1 + $0x260] sm:$0xff]
  %v91 = vld [vmem:[%s1 + $0x268] sm:$0xff]
  %v92 = vld [vmem:[%s1 + $0x270] sm:$0xff]
  %v93 = vld [vmem:[%s1 + $0x278] sm:$0xff]
  %v94 = vld [vmem:[%s1 + $0x280] sm:$0xff]
  %v95 = vld [vmem:[%s1 + $0x288] sm:$0xff]
  %v96 = vld [vmem:[%s1 + $0x290] sm:$0xff]
  %v97 = vld [vmem:[%s1 + $0x298] sm:$0xff]
  %v98 = vld [vmem:[%s1 + $0x2a0] sm:$0xff]
  %v99 = vld [vmem:[%s1 + $0x2a8] sm:$0xff]
  %v100 = vld [vmem:[%s1 + $0x2b0] sm:$0xff]
  %v101 = vld [vmem:[%s1 + $0x2b8] sm:$0xff]
  %v102 = vld [vmem:[%s1 + $0x2c0] sm:$0xff]
  %v103 = vld [vmem:[%s1 + $0x2c8] sm:$0xff]
  %v104 = vld [vmem:[%s1 + $0x2d0] sm:$0xff]
  %v105 = vld [vmem:[%s1 + $0x2d8] sm:$0xff]
  %v106 = vld [vmem:[%s1 + $0x2e0] sm:$0xff]
  %v107 = vld [vmem:[%s1 + $0x2e8] sm:$0xff]
  %v108 = vld [vmem:[%s1 + $0x2f0] sm:$0xff]
  %v109 = vld [vmem:[%s1 + $0x2f8] sm:$0xff]
  %v110 = vld [vmem:[%s1 + $0x300] sm:$0xff]
  %v111 = vld [vmem:[%s1 + $0x308] sm:$0xff]
  %v112 = vld [vmem:[%s1 + $0x310] sm:$0xff]
  %v113 = vld [vmem:[%s1 + $0x318] sm:$0xff]
  %v114 = vld [vmem:[%s1 + $0x320] sm:$0xff]
  %v115 = vld [vmem:[%s1 + $0x328] sm:$0xff]
  %v116 = vld [vmem:[%s1 + $0x330] sm:$0xff]
  %v117 = vld [vmem:[%s1 + $0x338] sm:$0xff]
  %v118 = vld [vmem:[%s1 + $0x340] sm:$0xff]
  %v119 = vld [vmem:[%s1 + $0x348] sm:$0xff]
  %v120 = vld [vmem:[%s1 + $0x350] sm:$0xff]
  %v121 = vld [vmem:[%s1 + $0x358] sm:$0xff]
  %v122 = vld [vmem:[%s1 + $0x360] sm:$0xff]
  %v123 = vld [vmem:[%s1 + $0x368] sm:$0xff]
  %v124 = vld [vmem:[%s1 + $0x370] sm:$0xff]
  %v125 = vld [vmem:[%s1 + $0x378] sm:$0xff]
  %v126 = vld [vmem:[%s1 + $0x380] sm:$0xff]
  %v127 = vld [vmem:[%s1 + $0x388] sm:$0xff]
  %v128 = vld [vmem:[%s1 + $0x390] sm:$0xff]
  %v129 = vld [vmem:[%s1 + $0x398] sm:$0xff]
  %v130 = vld [vmem:[%s1 + $0x3a0] sm:$0xff]
  %v131 = vld [vmem:[%s1 + $0x3a8] sm:$0xff]
  %v132 = vld [vmem:[%s1 + $0x3b0] sm:$0xff]
  %v133 = vld [vmem:[%s1 + $0x3b8] sm:$0xff]
  %v134 = vld [vmem:[%s1 + $0x3c0] sm:$0xff]
  %v135 = vld [vmem:[%s1 + $0x3c8] sm:$0xff]
  %v136 = vld [vmem:[%s1 + $0x3d0] sm:$0xff]
  %v137 = vld [vmem:[%s1 + $0x3d8] sm:$0xff]
  %v138 = vld [vmem:[%s1 + $0x3e0] sm:$0xff]
  %v139 = vld [vmem:[%s1 + $0x3e8] sm:$0xff]
  %v140 = vld [vmem:[%s0] sm:$0xff]
  %v141 = vld [vmem:[%s0 + $0x8] sm:$0xff]
  %v142 = vld [vmem:[%s0 + $0x10] sm:$0xff]
  %v143 = vld [vmem:[%s0 + $0x18] sm:$0xff]
  %v144 = vld [vmem:[%s0 + $0x20] sm:$0xff]
  %v145 = vld [vmem:[%s0 + $0x28] sm:$0xff]
  %v146 = vld [vmem:[%s0 + $0x30] sm:$0xff]
  %v147 = vld [vmem:[%s0 + $0x38] sm:$0xff]
  %v148 = vld [vmem:[%s0 + $0x40] sm:$0xff]
  %v149 = vld [vmem:[%s0 + $0x48] sm:$0xff]
  %v150 = vld [vmem:[%s0 + $0x50] sm:$0xff]
  %v151 = vld [vmem:[%s0 + $0x58] sm:$0xff]
  %v152 = vld [vmem:[%s0 + $0x60] sm:$0xff]
  %v153 = vld [vmem:[%s0 + $0x68] sm:$0xff]
  %v154 = vld [vmem:[%s0 + $0x70] sm:$0xff]
  %v155 = vld [vmem:[%s0 + $0x78] sm:$0xff]
  %v156 = vld [vmem:[%s0 + $0x80] sm:$0xff]
  %v157 = vld [vmem:[%s0 + $0x88] sm:$0xff]
  %v158 = vld [vmem:[%s0 + $0x90] sm:$0xff]
  %v159 = vld [vmem:[%s0 + $0x98] sm:$0xff]
  %v160 = vld [vmem:[%s0 + $0xa0] sm:$0xff]
  %v161 = vld [vmem:[%s0 + $0xa8] sm:$0xff]
  %v162 = vld [vmem:[%s0 + $0xb0] sm:$0xff]
  %v163 = vld [vmem:[%s0 + $0xb8] sm:$0xff]
  %v164 = vld [vmem:[%s0 + $0xc0] sm:$0xff]
  %v165 = vld [vmem:[%s0 + $0xc8] sm:$0xff]
  %v166 = vld [vmem:[%s0 + $0xd0] sm:$0xff]
  %v167 = vld [vmem:[%s0 + $0xd8] sm:$0xff]
  %v168 = vld [vmem:[%s0 + $0xe0] sm:$0xff]
  %v169 = vld [vmem:[%s0 + $0xe8] sm:$0xff]
  %v170 = vld [vmem:[%s0 + $0xf0] sm:$0xff]
  %v171 = vld [vmem:[%s0 + $0xf8] sm:$0xff]
  %v172 = vld [vmem:[%s0 + $0x100] sm:$0xff]
  %v173 = vld [vmem:[%s0 + $0x108] sm:$0xff]
  %v174 = vld [vmem:[%s0 + $0x110] sm:$0xff]
  %v175 = vld [vmem:[%s0 + $0x118] sm:$0xff]
  %v176 = vld [vmem:[%s0 + $0x120] sm:$0xff]
  %v177 = vld [vmem:[%s0 + $0x128] sm:$0xff]
  %v178 = vld [vmem:[%s0 + $0x130] sm:$0xff]
  %v179 = vld [vmem:[%s0 + $0x138] sm:$0xff]
  %v180 = vld [vmem:[%s0 + $0x140] sm:$0xff]
  %v181 = vld [vmem:[%s0 + $0x148] sm:$0xff]
  %v182 = vld [vmem:[%s0 + $0x150] sm:$0xff]
  %v183 = vld [vmem:[%s0 + $0x158] sm:$0xff]
  %v184 = vld [vmem:[%s0 + $0x160] sm:$0xff]
  %v185 = vld [vmem:[%s0 + $0x168] sm:$0xff]
  %v186 = vld [vmem:[%s0 + $0x170] sm:$0xff]
  %v187 = vld [vmem:[%s0 + $0x178] sm:$0xff]
  %v188 = vld [vmem:[%s0 + $0x180] sm:$0xff]
  %v189 = vld [vmem:[%s0 + $0x188] sm:$0xff]
  %v190 = vld [vmem:[%s0 + $0x190] sm:$0xff]
  %v191 = vld [vmem:[%s0 + $0x198] sm:$0xff]
  %v192 = vld [vmem:[%s0 + $0x1a0] sm:$0xff]
  %v193 = vld [vmem:[%s0 + $0x1a8] sm:$0xff]
  %v194 = vld [vmem:[%s0 + $0x1b0] sm:$0xff]
  %v195 = vld [vmem:[%s0 + $0x1b8] sm:$0xff]
  %v196 = vld [vmem:[%s0 + $0x1c0] sm:$0xff]
  %v197 = vld [vmem:[%s0 + $0x1c8] sm:$0xff]
  %v198 = vld [vmem:[%s0 + $0x1d0] sm:$0xff]
  %v199 = vld [vmem:[%s0 + $0x1d8] sm:$0xff]
  %v200 = vld [vmem:[%s0 + $0x1e0] sm:$0xff]
  %v201 = vld [vmem:[%s0 + $0x1e8] sm:$0xff]
  %v202 = vld [vmem:[%s0 + $0x1f0] sm:$0xff]
  %v203 = vld [vmem:[%s0 + $0x1f8] sm:$0xff]
  %v204 = vld [vmem:[%s0 + $0x200] sm:$0xff]
  %v205 = vld [vmem:[%s0 + $0x208] sm:$0xff]
  %v206 = vld [vmem:[%s0 + $0x210] sm:$0xff]
  %v207 = vld [vmem:[%s0 + $0x218] sm:$0xff]
  %v208 = vld [vmem:[%s0 + $0x220] sm:$0xff]
  %v209 = vld [vmem:[%s0 + $0x228] sm:$0xff]
  %v210 = vld [vmem:[%s0 + $0x230] sm:$0xff]
  %v211 = vld [vmem:[%s0 + $0x238] sm:$0xff]
  %v212 = vld [vmem:[%s0 + $0x240] sm:$0xff]
  %v213 = vld [vmem:[%s0 + $0x248] sm:$0xff]
  %v214 = vld [vmem:[%s0 + $0x250] sm:$0xff]
  %v215 = vld [vmem:[%s0 + $0x258] sm:$0xff]
  %v216 = vld [vmem:[%s0 + $0x260] sm:$0xff]
  %v217 = vld [vmem:[%s0 + $0x268] sm:$0xff]
  %v218 = vld [vmem:[%s0 + $0x270] sm:$0xff]
  %v219 = vld [vmem:[%s0 + $0x278] sm:$0xff]
  %v220 = vld [vmem:[%s0 + $0x280] sm:$0xff]
  %v221 = vld [vmem:[%s0 + $0x288] sm:$0xff]
  %v222 = vld [vmem:[%s0 + $0x290] sm:$0xff]
  %v223 = vld [vmem:[%s0 + $0x298] sm:$0xff]
  %v224 = vld [vmem:[%s0 + $0x2a0] sm:$0xff]
  %v225 = vld [vmem:[%s0 + $0x2a8] sm:$0xff]
  %v226 = vld [vmem:[%s0 + $0x2b0] sm:$0xff]
  %v227 = vld [vmem:[%s0 + $0x2b8] sm:$0xff]
  %v228 = vld [vmem:[%s0 + $0x2c0] sm:$0xff]
  %v229 = vld [vmem:[%s0 + $0x2c8] sm:$0xff]
  %v230 = vld [vmem:[%s0 + $0x2d0] sm:$0xff]
  %v231 = vld [vmem:[%s0 + $0x2d8] sm:$0xff]
  %v232 = vld [vmem:[%s0 + $0x2e0] sm:$0xff]
  %v233 = vld [vmem:[%s0 + $0x2e8] sm:$0xff]
  %v234 = vld [vmem:[%s0 + $0x2f0] sm:$0xff]
  %v235 = vld [vmem:[%s0 + $0x2f8] sm:$0xff]
  %v236 = vld [vmem:[%s0 + $0x300] sm:$0xff]
  %v237 = vld [vmem:[%s0 + $0x308] sm:$0xff]
  %v238 = vld [vmem:[%s0 + $0x310] sm:$0xff]
  %v239 = vld [vmem:[%s0 + $0x318] sm:$0xff]
  %v240 = vld [vmem:[%s0 + $0x320] sm:$0xff]
  %v241 = vld [vmem:[%s0 + $0x328] sm:$0xff]
  %v242 = vld [vmem:[%s0 + $0x330] sm:$0xff]
  %v243 = vld [vmem:[%s0 + $0x338] sm:$0xff]
  %v244 = vld [vmem:[%s0 + $0x340] sm:$0xff]
  %v245 = vld [vmem:[%s0 + $0x348] sm:$0xff]
  %v246 = vld [vmem:[%s0 + $0x350] sm:$0xff]
  %v247 = vld [vmem:[%s0 + $0x358] sm:$0xff]
  %v248 = vld [vmem:[%s0 + $0x360] sm:$0xff]
  %v249 = vld [vmem:[%s0 + $0x368] sm:$0xff]
  %v250 = vld [vmem:[%s0 + $0x370] sm:$0xff]
  %v251 = vld [vmem:[%s0 + $0x378] sm:$0xff]
  %v252 = vld [vmem:[%s0 + $0x380] sm:$0xff]
  %v253 = vld [vmem:[%s0 + $0x388] sm:$0xff]
  %v254 = vld [vmem:[%s0 + $0x390] sm:$0xff]
  %v255 = vld [vmem:[%s0 + $0x398] sm:$0xff]
  %v256 = vld [vmem:[%s0 + $0x3a0] sm:$0xff]
  %v257 = vld [vmem:[%s0 + $0x3a8] sm:$0xff]
  %v258 = vld [vmem:[%s0 + $0x3b0] sm:$0xff]
  %v259 = vld [vmem:[%s0 + $0x3b8] sm:$0xff]
  %v260 = vld [vmem:[%s0 + $0x3c0] sm:$0xff]
  %v261 = vld [vmem:[%s0 + $0x3c8] sm:$0xff]
  %v262 = vld [vmem:[%s0 + $0x3d0] sm:$0xff]
  %v263 = vld [vmem:[%s0 + $0x3d8] sm:$0xff]
  %v264 = vld [vmem:[%s0 + $0x3e0] sm:$0xff]
  %v265 = vld [vmem:[%s0 + $0x3e8] sm:$0xff]
  %v266 = vld [vmem:[%s0 + $0x3f0] sm:$0xff]
  %v267 = vld [vmem:[%s0 + $0x3f8] sm:$0xff]
  %v268 = vld [vmem:[%s0 + $0x400] sm:$0xff]
  %v269 = vld [vmem:[%s0 + $0x408] sm:$0xff]
  %v270 = vld [vmem:[%s0 + $0x410] sm:$0xff]
  %v271 = vld [vmem:[%s0 + $0x418] sm:$0xff]
  %v272 = vld [vmem:[%s0 + $0x420] sm:$0xff]
  %v273 = vld [vmem:[%s0 + $0x428] sm:$0xff]
  %v274 = vld [vmem:[%s0 + $0x430] sm:$0xff]
  %v275 = vld [vmem:[%s0 + $0x438] sm:$0xff]
  %v276 = vld [vmem:[%s0 + $0x440] sm:$0xff]
  %v277 = vld [vmem:[%s0 + $0x448] sm:$0xff]
  %v278 = vld [vmem:[%s0 + $0x450] sm:$0xff]
  %v279 = vld [vmem:[%s0 + $0x458] sm:$0xff]
  %v280 = vld [vmem:[%s0 + $0x460] sm:$0xff]
  %v281 = vld [vmem:[%s0 + $0x468] sm:$0xff]
  %v282 = vld [vmem:[%s0 + $0x470] sm:$0xff]
  %v283 = vld [vmem:[%s0 + $0x478] sm:$0xff]
  %v284 = vld [vmem:[%s0 + $0x480] sm:$0xff]
  %v285 = vld [vmem:[%s0 + $0x488] sm:$0xff]
  %v286 = vld [vmem:[%s0 + $0x490] sm:$0xff]
  %v287 = vld [vmem:[%s0 + $0x498] sm:$0xff]
  %v288 = vld [vmem:[%s0 + $0x4a0] sm:$0xff]
  %v289 = vld [vmem:[%s0 + $0x4a8] sm:$0xff]
  %v290 = vld [vmem:[%s0 + $0x4b0] sm:$0xff]
  %v291 = vld [vmem:[%s0 + $0x4b8] sm:$0xff]
  %v292 = vld [vmem:[%s0 + $0x4c0] sm:$0xff]
  %v293 = vld [vmem:[%s0 + $0x4c8] sm:$0xff]
  %v294 = vld [vmem:[%s0 + $0x4d0] sm:$0xff]
  %v295 = vld [vmem:[%s0 + $0x4d8] sm:$0xff]
  %v296 = vld [vmem:[%s0 + $0x4e0] sm:$0xff]
  %v297 = vld [vmem:[%s0 + $0x4e8] sm:$0xff]
  %v298 = vld [vmem:[%s0 + $0x4f0] sm:$0xff]
  %v299 = vld [vmem:[%s0 + $0x4f8] sm:$0xff]
  %v300 = vld [vmem:[%s0 + $0x500] sm:$0xff]
  %v301 = vld [vmem:[%s0 + $0x508] sm:$0xff]
  %v302 = vld [vmem:[%s0 + $0x510] sm:$0xff]
  %v303 = vld [vmem:[%s0 + $0x518] sm:$0xff]
  %v304 = vld [vmem:[%s0 + $0x520] sm:$0xff]
  %v305 = vld [vmem:[%s0 + $0x528] sm:$0xff]
  %v306 = vld [vmem:[%s0 + $0x530] sm:$0xff]
  %v307 = vld [vmem:[%s0 + $0x538] sm:$0xff]
  %v308 = vld [vmem:[%s0 + $0x540] sm:$0xff]
  %v309 = vld [vmem:[%s0 + $0x548] sm:$0xff]
  %v310 = vld [vmem:[%s0 + $0x550] sm:$0xff]
  %v311 = vld [vmem:[%s0 + $0x558] sm:$0xff]
  %v312 = vld [vmem:[%s0 + $0x560] sm:$0xff]
  %v313 = vld [vmem:[%s0 + $0x568] sm:$0xff]
  %v314 = vld [vmem:[%s0 + $0x570] sm:$0xff]
  %v315 = vld [vmem:[%s0 + $0x578] sm:$0xff]
  %v316 = vld [vmem:[%s0 + $0x580] sm:$0xff]
  %v317 = vld [vmem:[%s0 + $0x588] sm:$0xff]
  %v318 = vld [vmem:[%s0 + $0x590] sm:$0xff]
  %v319 = vld [vmem:[%s0 + $0x598] sm:$0xff]
  %v320 = vld [vmem:[%s0 + $0x5a0] sm:$0xff]
  %v321 = vld [vmem:[%s0 + $0x5a8] sm:$0xff]
  %v322 = vld [vmem:[%s0 + $0x5b0] sm:$0xff]
  %v323 = vld [vmem:[%s0 + $0x5b8] sm:$0xff]
  %v324 = vld [vmem:[%s0 + $0x5c0] sm:$0xff]
  %v325 = vld [vmem:[%s0 + $0x5c8] sm:$0xff]
  %v326 = vld [vmem:[%s0 + $0x5d0] sm:$0xff]
  %v327 = vld [vmem:[%s0 + $0x5d8] sm:$0xff]
  %v328 = vld [vmem:[%s0 + $0x5e0] sm:$0xff]
  %v329 = vld [vmem:[%s0 + $0x5e8] sm:$0xff]
  %v330 = vld [vmem:[%s0 + $0x5f0] sm:$0xff]
  %v331 = vld [vmem:[%s0 + $0x5f8] sm:$0xff]
  %v332 = vld [vmem:[%s0 + $0x600] sm:$0xff]
  %v333 = vld [vmem:[%s0 + $0x608] sm:$0xff]
  %v334 = vld [vmem:[%s0 + $0x610] sm:$0xff]
  %v335 = vld [vmem:[%s0 + $0x618] sm:$0xff]
  %v336 = vld [vmem:[%s0 + $0x620] sm:$0xff]
  %v337 = vld [vmem:[%s0 + $0x628] sm:$0xff]
  %v338 = vld [vmem:[%s0 + $0x630] sm:$0xff]
  %v339 = vld [vmem:[%s0 + $0x638] sm:$0xff]
  %v340 = vld [vmem:[%s0 + $0x640] sm:$0xff]
  %v341 = vld [vmem:[%s0 + $0x648] sm:$0xff]
  %v342 = vld [vmem:[%s0 + $0x650] sm:$0xff]
  %v343 = vld [vmem:[%s0 + $0x658] sm:$0xff]
  %v344 = vld [vmem:[%s0 + $0x660] sm:$0xff]
  %v345 = vld [vmem:[%s0 + $0x668] sm:$0xff]
  %v346 = vld [vmem:[%s0 + $0x670] sm:$0xff]
  %v347 = vld [vmem:[%s0 + $0x678] sm:$0xff]
  %v348 = vld [vmem:[%s0 + $0x680] sm:$0xff]
  %v349 = vld [vmem:[%s0 + $0x688] sm:$0xff]
  %v350 = vld [vmem:[%s0 + $0x690] sm:$0xff]
  %v351 = vld [vmem:[%s0 + $0x698] sm:$0xff]
  %v352 = vld [vmem:[%s0 + $0x6a0] sm:$0xff]
  %v353 = vld [vmem:[%s0 + $0x6a8] sm:$0xff]
  %v354 = vld [vmem:[%s0 + $0x6b0] sm:$0xff]
  %v355 = vld [vmem:[%s0 + $0x6b8] sm:$0xff]
  %vm356 = vcmask 785408
  %v358 = vsel %vm356, %v20, 0
  %v361 = vsel %vm356, %v27, 0
  %v364 = vsel %vm356, %v34, 0
  %v367 = vsel %vm356, %v41, 0
  %v370 = vsel %vm356, %v48, 0
  %v373 = vsel %vm356, %v55, 0
  %v376 = vsel %vm356, %v62, 0
  %v379 = vsel %vm356, %v69, 0
  %v382 = vsel %vm356, %v76, 0
  %v385 = vsel %vm356, %v83, 0
  %v388 = vsel %vm356, %v90, 0
  %v391 = vsel %vm356, %v97, 0
  %v394 = vsel %vm356, %v104, 0
  %v397 = vsel %vm356, %v111, 0
  %v400 = vsel %vm356, %v118, 0
  %v403 = vsel %vm356, %v125, 0
  %v406 = vsel %vm356, %v132, 0
  %v409 = vsel %vm356, %v139, 0
  %411 = vmatprep.subr.mxu0 %v171
  %412 = vmatpush1.msra.mxu0 %v170
  %413 = vmatprep.subr.mxu0 %v169
  %414 = vmatpush1.msra.mxu0 %v168
  %415 = vmatprep.subr.mxu0 %v167
  %416 = vmatpush1.msra.mxu0 %v166
  %417 = vmatprep.subr.mxu0 %v165
  %418 = vmatpush1.msra.mxu0 %v164
  %419 = vmatprep.subr.mxu0 %v163
  %420 = vmatpush1.msra.mxu0 %v162
  %421 = vmatprep.subr.mxu0 %v161
  %422 = vmatpush1.msra.mxu0 %v160
  %423 = vmatprep.subr.mxu0 %v159
  %424 = vmatpush1.msra.mxu0 %v158
  %425 = vmatprep.subr.mxu0 %v157
  %426 = vmatpush1.msra.mxu0 %v156
  %427 = vmatprep.subr.mxu0 %v155
  %428 = vmatpush1.msra.mxu0 %v154
  %429 = vmatprep.subr.mxu0 %v153
  %430 = vmatpush1.msra.mxu0 %v152
  %431 = vmatprep.subr.mxu0 %v151
  %432 = vmatpush1.msra.mxu0 %v150
  %433 = vmatprep.subr.mxu0 %v149
  %434 = vmatpush1.msra.mxu0 %v148
  %435 = vmatprep.subr.mxu0 %v147
  %436 = vmatpush1.msra.mxu0 %v146
  %437 = vmatprep.subr.mxu0 %v145
  %438 = vmatpush1.msra.mxu0 %v144
  %439 = vmatprep.subr.mxu0 %v143
  %440 = vmatpush1.msra.mxu0 %v142
  %441 = vmatprep.subr.mxu0 %v141
  %442 = vmatpush1.msra.mxu0 %v140
  %443 = vmatprep.subr.mxu0 %v203
  %444 = vmatpush2.msra.mxu0 %v202
  %445 = vmatprep.subr.mxu0 %v201
  %446 = vmatpush2.msra.mxu0 %v200
  %447 = vmatprep.subr.mxu0 %v199
  %448 = vmatpush2.msra.mxu0 %v198
  %449 = vmatprep.subr.mxu0 %v197
  %450 = vmatpush2.msra.mxu0 %v196
  %451 = vmatprep.subr.mxu0 %v195
  %452 = vmatpush2.msra.mxu0 %v194
  %453 = vmatprep.subr.mxu0 %v193
  %454 = vmatpush2.msra.mxu0 %v192
  %455 = vmatprep.subr.mxu0 %v191
  %456 = vmatpush2.msra.mxu0 %v190
  %457 = vmatprep.subr.mxu0 %v189
  %458 = vmatpush2.msra.mxu0 %v188
  %459 = vmatprep.subr.mxu0 %v187
  %460 = vmatpush2.msra.mxu0 %v186
  %461 = vmatprep.subr.mxu0 %v185
  %462 = vmatpush2.msra.mxu0 %v184
  %463 = vmatprep.subr.mxu0 %v183
  %464 = vmatpush2.msra.mxu0 %v182
  %465 = vmatprep.subr.mxu0 %v181
  %466 = vmatpush2.msra.mxu0 %v180
  %467 = vmatprep.subr.mxu0 %v179
  %468 = vmatpush2.msra.mxu0 %v178
  %469 = vmatprep.subr.mxu0 %v177
  %470 = vmatpush2.msra.mxu0 %v176
  %471 = vmatprep.subr.mxu0 %v175
  %472 = vmatpush2.msra.mxu0 %v174
  %473 = vmatprep.subr.mxu0 %v173
  %474 = vmatpush2.msra.mxu0 %v172
  %475 = vmatprep.mubr.f32.mxu0 %v15
  %476 = vmatmul.mubr.f32.gmra.mxu0 %v14
  %v477 = vpop.f32.mrf.mxu0
  %v478 = vadd.f32 0.0, %v477
  %v479 = vpop.f32.mrf.mxu0
  %v480 = vadd.f32 0.0, %v479
  %481 = vmatprep.mubr.f32.mxu0 %v22
  %482 = vmatmul.mubr.f32.gmra.mxu0 %v21
  %v483 = vpop.f32.mrf.mxu0
  %v484 = vadd.f32 0.0, %v483
  %v485 = vpop.f32.mrf.mxu0
  %v486 = vadd.f32 0.0, %v485
  %487 = vmatprep.mubr.f32.mxu0 %v29
  %488 = vmatmul.mubr.f32.gmra.mxu0 %v28
  %v489 = vpop.f32.mrf.mxu0
  %v490 = vadd.f32 0.0, %v489
  %v491 = vpop.f32.mrf.mxu0
  %v492 = vadd.f32 0.0, %v491
  %493 = vmatprep.mubr.f32.mxu0 %v36
  %494 = vmatmul.mubr.f32.gmra.mxu0 %v35
  %v495 = vpop.f32.mrf.mxu0
  %v496 = vadd.f32 0.0, %v495
  %v497 = vpop.f32.mrf.mxu0
  %v498 = vadd.f32 0.0, %v497
  %499 = vmatprep.mubr.f32.mxu0 %v43
  %500 = vmatmul.mubr.f32.gmra.mxu0 %v42
  %v501 = vpop.f32.mrf.mxu0
  %v502 = vadd.f32 0.0, %v501
  %v503 = vpop.f32.mrf.mxu0
  %v504 = vadd.f32 0.0, %v503
  %505 = vmatprep.mubr.f32.mxu0 %v50
  %506 = vmatmul.mubr.f32.gmra.mxu0 %v49
  %v507 = vpop.f32.mrf.mxu0
  %v508 = vadd.f32 0.0, %v507
  %v509 = vpop.f32.mrf.mxu0
  %v510 = vadd.f32 0.0, %v509
  %511 = vmatprep.mubr.f32.mxu0 %v57
  %512 = vmatmul.mubr.f32.gmra.mxu0 %v56
  %v513 = vpop.f32.mrf.mxu0
  %v514 = vadd.f32 0.0, %v513
  %v515 = vpop.f32.mrf.mxu0
  %v516 = vadd.f32 0.0, %v515
  %517 = vmatprep.mubr.f32.mxu0 %v64
  %518 = vmatmul.mubr.f32.gmra.mxu0 %v63
  %v519 = vpop.f32.mrf.mxu0
  %v520 = vadd.f32 0.0, %v519
  %v521 = vpop.f32.mrf.mxu0
  %v522 = vadd.f32 0.0, %v521
  %523 = vmatprep.mubr.f32.mxu0 %v71
  %524 = vmatmul.mubr.f32.gmra.mxu0 %v70
  %v525 = vpop.f32.mrf.mxu0
  %v526 = vadd.f32 0.0, %v525
  %v527 = vpop.f32.mrf.mxu0
  %v528 = vadd.f32 0.0, %v527
  %529 = vmatprep.mubr.f32.mxu0 %v78
  %530 = vmatmul.mubr.f32.gmra.mxu0 %v77
  %v531 = vpop.f32.mrf.mxu0
  %v532 = vadd.f32 0.0, %v531
  %v533 = vpop.f32.mrf.mxu0
  %v534 = vadd.f32 0.0, %v533
  %535 = vmatprep.mubr.f32.mxu0 %v85
  %536 = vmatmul.mubr.f32.gmra.mxu0 %v84
  %v537 = vpop.f32.mrf.mxu0
  %v538 = vadd.f32 0.0, %v537
  %v539 = vpop.f32.mrf.mxu0
  %v540 = vadd.f32 0.0, %v539
  %541 = vmatprep.mubr.f32.mxu0 %v92
  %542 = vmatmul.mubr.f32.gmra.mxu0 %v91
  %v543 = vpop.f32.mrf.mxu0
  %v544 = vadd.f32 0.0, %v543
  %v545 = vpop.f32.mrf.mxu0
  %v546 = vadd.f32 0.0, %v545
  %547 = vmatprep.mubr.f32.mxu0 %v99
  %548 = vmatmul.mubr.f32.gmra.mxu0 %v98
  %v549 = vpop.f32.mrf.mxu0
  %v550 = vadd.f32 0.0, %v549
  %v551 = vpop.f32.mrf.mxu0
  %v552 = vadd.f32 0.0, %v551
  %553 = vmatprep.mubr.f32.mxu0 %v106
  %554 = vmatmul.mubr.f32.gmra.mxu0 %v105
  %v555 = vpop.f32.mrf.mxu0
  %v556 = vadd.f32 0.0, %v555
  %v557 = vpop.f32.mrf.mxu0
  %v558 = vadd.f32 0.0, %v557
  %559 = vmatprep.mubr.f32.mxu0 %v113
  %560 = vmatmul.mubr.f32.gmra.mxu0 %v112
  %v561 = vpop.f32.mrf.mxu0
  %v562 = vadd.f32 0.0, %v561
  %v563 = vpop.f32.mrf.mxu0
  %v564 = vadd.f32 0.0, %v563
  %565 = vmatprep.mubr.f32.mxu0 %v120
  %566 = vmatmul.mubr.f32.gmra.mxu0 %v119
  %v567 = vpop.f32.mrf.mxu0
  %v568 = vadd.f32 0.0, %v567
  %v569 = vpop.f32.mrf.mxu0
  %v570 = vadd.f32 0.0, %v569
  %571 = vmatprep.mubr.f32.mxu0 %v127
  %572 = vmatmul.mubr.f32.gmra.mxu0 %v126
  %v573 = vpop.f32.mrf.mxu0
  %v574 = vadd.f32 0.0, %v573
  %v575 = vpop.f32.mrf.mxu0
  %v576 = vadd.f32 0.0, %v575
  %577 = vmatprep.mubr.f32.mxu0 %v134
  %578 = vmatmul.mubr.f32.gmra.mxu0 %v133
  %v579 = vpop.f32.mrf.mxu0
  %v580 = vadd.f32 0.0, %v579
  %v581 = vpop.f32.mrf.mxu0
  %v582 = vadd.f32 0.0, %v581
  %583 = vdwg.mxu0
  %584 = vmatprep.subr.mxu0 %v235
  %585 = vmatpush1.msra.mxu0 %v234
  %586 = vmatprep.subr.mxu0 %v233
  %587 = vmatpush1.msra.mxu0 %v232
  %588 = vmatprep.subr.mxu0 %v231
  %589 = vmatpush1.msra.mxu0 %v230
  %590 = vmatprep.subr.mxu0 %v229
  %591 = vmatpush1.msra.mxu0 %v228
  %592 = vmatprep.subr.mxu0 %v227
  %593 = vmatpush1.msra.mxu0 %v226
  %594 = vmatprep.subr.mxu0 %v225
  %595 = vmatpush1.msra.mxu0 %v224
  %596 = vmatprep.subr.mxu0 %v223
  %597 = vmatpush1.msra.mxu0 %v222
  %598 = vmatprep.subr.mxu0 %v221
  %599 = vmatpush1.msra.mxu0 %v220
  %600 = vmatprep.subr.mxu0 %v219
  %601 = vmatpush1.msra.mxu0 %v218
  %602 = vmatprep.subr.mxu0 %v217
  %603 = vmatpush1.msra.mxu0 %v216
  %604 = vmatprep.subr.mxu0 %v215
  %605 = vmatpush1.msra.mxu0 %v214
  %606 = vmatprep.subr.mxu0 %v213
  %607 = vmatpush1.msra.mxu0 %v212
  %608 = vmatprep.subr.mxu0 %v211
  %609 = vmatpush1.msra.mxu0 %v210
  %610 = vmatprep.subr.mxu0 %v209
  %611 = vmatpush1.msra.mxu0 %v208
  %612 = vmatprep.subr.mxu0 %v207
  %613 = vmatpush1.msra.mxu0 %v206
  %614 = vmatprep.subr.mxu0 %v205
  %615 = vmatpush1.msra.mxu0 %v204
  %616 = vmatprep.subr.mxu0 %v267
  %617 = vmatpush2.msra.mxu0 %v266
  %618 = vmatprep.subr.mxu0 %v265
  %619 = vmatpush2.msra.mxu0 %v264
  %620 = vmatprep.subr.mxu0 %v263
  %621 = vmatpush2.msra.mxu0 %v262
  %622 = vmatprep.subr.mxu0 %v261
  %623 = vmatpush2.msra.mxu0 %v260
  %624 = vmatprep.subr.mxu0 %v259
  %625 = vmatpush2.msra.mxu0 %v258
  %626 = vmatprep.subr.mxu0 %v257
  %627 = vmatpush2.msra.mxu0 %v256
  %628 = vmatprep.subr.mxu0 %v255
  %629 = vmatpush2.msra.mxu0 %v254
  %630 = vmatprep.subr.mxu0 %v253
  %631 = vmatpush2.msra.mxu0 %v252
  %632 = vmatprep.subr.mxu0 %v251
  %633 = vmatpush2.msra.mxu0 %v250
  %634 = vmatprep.subr.mxu0 %v249
  %635 = vmatpush2.msra.mxu0 %v248
  %636 = vmatprep.subr.mxu0 %v247
  %637 = vmatpush2.msra.mxu0 %v246
  %638 = vmatprep.subr.mxu0 %v245
  %639 = vmatpush2.msra.mxu0 %v244
  %640 = vmatprep.subr.mxu0 %v243
  %641 = vmatpush2.msra.mxu0 %v242
  %642 = vmatprep.subr.mxu0 %v241
  %643 = vmatpush2.msra.mxu0 %v240
  %644 = vmatprep.subr.mxu0 %v239
  %645 = vmatpush2.msra.mxu0 %v238
  %646 = vmatprep.subr.mxu0 %v237
  %647 = vmatpush2.msra.mxu0 %v236
  %648 = vmatprep.mubr.f32.mxu0 %v17
  %649 = vmatmul.mubr.f32.gmra.mxu0 %v16
  %v650 = vpop.f32.mrf.mxu0
  %v651 = vadd.f32 %v478, %v650
  %v652 = vpop.f32.mrf.mxu0
  %v653 = vadd.f32 %v480, %v652
  %654 = vmatprep.mubr.f32.mxu0 %v24
  %655 = vmatmul.mubr.f32.gmra.mxu0 %v23
  %v656 = vpop.f32.mrf.mxu0
  %v657 = vadd.f32 %v484, %v656
  %v658 = vpop.f32.mrf.mxu0
  %v659 = vadd.f32 %v486, %v658
  %660 = vmatprep.mubr.f32.mxu0 %v31
  %661 = vmatmul.mubr.f32.gmra.mxu0 %v30
  %v662 = vpop.f32.mrf.mxu0
  %v663 = vadd.f32 %v490, %v662
  %v664 = vpop.f32.mrf.mxu0
  %v665 = vadd.f32 %v492, %v664
  %666 = vmatprep.mubr.f32.mxu0 %v38
  %667 = vmatmul.mubr.f32.gmra.mxu0 %v37
  %v668 = vpop.f32.mrf.mxu0
  %v669 = vadd.f32 %v496, %v668
  %v670 = vpop.f32.mrf.mxu0
  %v671 = vadd.f32 %v498, %v670
  %672 = vmatprep.mubr.f32.mxu0 %v45
  %673 = vmatmul.mubr.f32.gmra.mxu0 %v44
  %v674 = vpop.f32.mrf.mxu0
  %v675 = vadd.f32 %v502, %v674
  %v676 = vpop.f32.mrf.mxu0
  %v677 = vadd.f32 %v504, %v676
  %678 = vmatprep.mubr.f32.mxu0 %v52
  %679 = vmatmul.mubr.f32.gmra.mxu0 %v51
  %v680 = vpop.f32.mrf.mxu0
  %v681 = vadd.f32 %v508, %v680
  %v682 = vpop.f32.mrf.mxu0
  %v683 = vadd.f32 %v510, %v682
  %684 = vmatprep.mubr.f32.mxu0 %v59
  %685 = vmatmul.mubr.f32.gmra.mxu0 %v58
  %v686 = vpop.f32.mrf.mxu0
  %v687 = vadd.f32 %v514, %v686
  %v688 = vpop.f32.mrf.mxu0
  %v689 = vadd.f32 %v516, %v688
  %690 = vmatprep.mubr.f32.mxu0 %v66
  %691 = vmatmul.mubr.f32.gmra.mxu0 %v65
  %v692 = vpop.f32.mrf.mxu0
  %v693 = vadd.f32 %v520, %v692
  %v694 = vpop.f32.mrf.mxu0
  %v695 = vadd.f32 %v522, %v694
  %696 = vmatprep.mubr.f32.mxu0 %v73
  %697 = vmatmul.mubr.f32.gmra.mxu0 %v72
  %v698 = vpop.f32.mrf.mxu0
  %v699 = vadd.f32 %v526, %v698
  %v700 = vpop.f32.mrf.mxu0
  %v701 = vadd.f32 %v528, %v700
  %702 = vmatprep.mubr.f32.mxu0 %v80
  %703 = vmatmul.mubr.f32.gmra.mxu0 %v79
  %v704 = vpop.f32.mrf.mxu0
  %v705 = vadd.f32 %v532, %v704
  %v706 = vpop.f32.mrf.mxu0
  %v707 = vadd.f32 %v534, %v706
  %708 = vmatprep.mubr.f32.mxu0 %v87
  %709 = vmatmul.mubr.f32.gmra.mxu0 %v86
  %v710 = vpop.f32.mrf.mxu0
  %v711 = vadd.f32 %v538, %v710
  %v712 = vpop.f32.mrf.mxu0
  %v713 = vadd.f32 %v540, %v712
  %714 = vmatprep.mubr.f32.mxu0 %v94
  %715 = vmatmul.mubr.f32.gmra.mxu0 %v93
  %v716 = vpop.f32.mrf.mxu0
  %v717 = vadd.f32 %v544, %v716
  %v718 = vpop.f32.mrf.mxu0
  %v719 = vadd.f32 %v546, %v718
  %720 = vmatprep.mubr.f32.mxu0 %v101
  %721 = vmatmul.mubr.f32.gmra.mxu0 %v100
  %v722 = vpop.f32.mrf.mxu0
  %v723 = vadd.f32 %v550, %v722
  %v724 = vpop.f32.mrf.mxu0
  %v725 = vadd.f32 %v552, %v724
  %726 = vmatprep.mubr.f32.mxu0 %v108
  %727 = vmatmul.mubr.f32.gmra.mxu0 %v107
  %v728 = vpop.f32.mrf.mxu0
  %v729 = vadd.f32 %v556, %v728
  %v730 = vpop.f32.mrf.mxu0
  %v731 = vadd.f32 %v558, %v730
  %732 = vmatprep.mubr.f32.mxu0 %v115
  %733 = vmatmul.mubr.f32.gmra.mxu0 %v114
  %v734 = vpop.f32.mrf.mxu0
  %v735 = vadd.f32 %v562, %v734
  %v736 = vpop.f32.mrf.mxu0
  %v737 = vadd.f32 %v564, %v736
  %738 = vmatprep.mubr.f32.mxu0 %v122
  %739 = vmatmul.mubr.f32.gmra.mxu0 %v121
  %v740 = vpop.f32.mrf.mxu0
  %v741 = vadd.f32 %v568, %v740
  %v742 = vpop.f32.mrf.mxu0
  %v743 = vadd.f32 %v570, %v742
  %744 = vmatprep.mubr.f32.mxu0 %v129
  %745 = vmatmul.mubr.f32.gmra.mxu0 %v128
  %v746 = vpop.f32.mrf.mxu0
  %v747 = vadd.f32 %v574, %v746
  %v748 = vpop.f32.mrf.mxu0
  %v749 = vadd.f32 %v576, %v748
  %750 = vmatprep.mubr.f32.mxu0 %v136
  %751 = vmatmul.mubr.f32.gmra.mxu0 %v135
  %v752 = vpop.f32.mrf.mxu0
  %v753 = vadd.f32 %v580, %v752
  %v754 = vpop.f32.mrf.mxu0
  %v755 = vadd.f32 %v582, %v754
  %756 = vdwg.mxu0
  %757 = vmatprep.subr.mxu0 %v299
  %758 = vmatpush1.msra.mxu0 %v298
  %759 = vmatprep.subr.mxu0 %v297
  %760 = vmatpush1.msra.mxu0 %v296
  %761 = vmatprep.subr.mxu0 %v295
  %762 = vmatpush1.msra.mxu0 %v294
  %763 = vmatprep.subr.mxu0 %v293
  %764 = vmatpush1.msra.mxu0 %v292
  %765 = vmatprep.subr.mxu0 %v291
  %766 = vmatpush1.msra.mxu0 %v290
  %767 = vmatprep.subr.mxu0 %v289
  %768 = vmatpush1.msra.mxu0 %v288
  %769 = vmatprep.subr.mxu0 %v287
  %770 = vmatpush1.msra.mxu0 %v286
  %771 = vmatprep.subr.mxu0 %v285
  %772 = vmatpush1.msra.mxu0 %v284
  %773 = vmatprep.subr.mxu0 %v283
  %774 = vmatpush1.msra.mxu0 %v282
  %775 = vmatprep.subr.mxu0 %v281
  %776 = vmatpush1.msra.mxu0 %v280
  %777 = vmatprep.subr.mxu0 %v279
  %778 = vmatpush1.msra.mxu0 %v278
  %779 = vmatprep.subr.mxu0 %v277
  %780 = vmatpush1.msra.mxu0 %v276
  %781 = vmatprep.subr.mxu0 %v275
  %782 = vmatpush1.msra.mxu0 %v274
  %783 = vmatprep.subr.mxu0 %v273
  %784 = vmatpush1.msra.mxu0 %v272
  %785 = vmatprep.subr.mxu0 %v271
  %786 = vmatpush1.msra.mxu0 %v270
  %787 = vmatprep.subr.mxu0 %v269
  %788 = vmatpush1.msra.mxu0 %v268
  %789 = vmatprep.subr.mxu0 %v331
  %790 = vmatpush2.msra.mxu0 %v330
  %791 = vmatprep.subr.mxu0 %v329
  %792 = vmatpush2.msra.mxu0 %v328
  %793 = vmatprep.subr.mxu0 %v327
  %794 = vmatpush2.msra.mxu0 %v326
  %795 = vmatprep.subr.mxu0 %v325
  %796 = vmatpush2.msra.mxu0 %v324
  %797 = vmatprep.subr.mxu0 %v323
  %798 = vmatpush2.msra.mxu0 %v322
  %799 = vmatprep.subr.mxu0 %v321
  %800 = vmatpush2.msra.mxu0 %v320
  %801 = vmatprep.subr.mxu0 %v319
  %802 = vmatpush2.msra.mxu0 %v318
  %803 = vmatprep.subr.mxu0 %v317
  %804 = vmatpush2.msra.mxu0 %v316
  %805 = vmatprep.subr.mxu0 %v315
  %806 = vmatpush2.msra.mxu0 %v314
  %807 = vmatprep.subr.mxu0 %v313
  %808 = vmatpush2.msra.mxu0 %v312
  %809 = vmatprep.subr.mxu0 %v311
  %810 = vmatpush2.msra.mxu0 %v310
  %811 = vmatprep.subr.mxu0 %v309
  %812 = vmatpush2.msra.mxu0 %v308
  %813 = vmatprep.subr.mxu0 %v307
  %814 = vmatpush2.msra.mxu0 %v306
  %815 = vmatprep.subr.mxu0 %v305
  %816 = vmatpush2.msra.mxu0 %v304
  %817 = vmatprep.subr.mxu0 %v303
  %818 = vmatpush2.msra.mxu0 %v302
  %819 = vmatprep.subr.mxu0 %v301
  %820 = vmatpush2.msra.mxu0 %v300
  %821 = vmatprep.mubr.f32.mxu0 %v19
  %822 = vmatmul.mubr.f32.gmra.mxu0 %v18
  %v823 = vpop.f32.mrf.mxu0
  %v824 = vadd.f32 %v651, %v823
  %v825 = vpop.f32.mrf.mxu0
  %v826 = vadd.f32 %v653, %v825
  %827 = vmatprep.mubr.f32.mxu0 %v26
  %828 = vmatmul.mubr.f32.gmra.mxu0 %v25
  %v829 = vpop.f32.mrf.mxu0
  %v830 = vadd.f32 %v657, %v829
  %v831 = vpop.f32.mrf.mxu0
  %v832 = vadd.f32 %v659, %v831
  %833 = vmatprep.mubr.f32.mxu0 %v33
  %834 = vmatmul.mubr.f32.gmra.mxu0 %v32
  %v835 = vpop.f32.mrf.mxu0
  %v836 = vadd.f32 %v663, %v835
  %v837 = vpop.f32.mrf.mxu0
  %v838 = vadd.f32 %v665, %v837
  %839 = vmatprep.mubr.f32.mxu0 %v40
  %840 = vmatmul.mubr.f32.gmra.mxu0 %v39
  %v841 = vpop.f32.mrf.mxu0
  %v842 = vadd.f32 %v669, %v841
  %v843 = vpop.f32.mrf.mxu0
  %v844 = vadd.f32 %v671, %v843
  %845 = vmatprep.mubr.f32.mxu0 %v47
  %846 = vmatmul.mubr.f32.gmra.mxu0 %v46
  %v847 = vpop.f32.mrf.mxu0
  %v848 = vadd.f32 %v675, %v847
  %v849 = vpop.f32.mrf.mxu0
  %v850 = vadd.f32 %v677, %v849
  %851 = vmatprep.mubr.f32.mxu0 %v54
  %852 = vmatmul.mubr.f32.gmra.mxu0 %v53
  %v853 = vpop.f32.mrf.mxu0
  %v854 = vadd.f32 %v681, %v853
  %v855 = vpop.f32.mrf.mxu0
  %v856 = vadd.f32 %v683, %v855
  %857 = vmatprep.mubr.f32.mxu0 %v61
  %858 = vmatmul.mubr.f32.gmra.mxu0 %v60
  %v859 = vpop.f32.mrf.mxu0
  %v860 = vadd.f32 %v687, %v859
  %v861 = vpop.f32.mrf.mxu0
  %v862 = vadd.f32 %v689, %v861
  %863 = vmatprep.mubr.f32.mxu0 %v68
  %864 = vmatmul.mubr.f32.gmra.mxu0 %v67
  %v865 = vpop.f32.mrf.mxu0
  %v866 = vadd.f32 %v693, %v865
  %v867 = vpop.f32.mrf.mxu0
  %v868 = vadd.f32 %v695, %v867
  %869 = vmatprep.mubr.f32.mxu0 %v75
  %870 = vmatmul.mubr.f32.gmra.mxu0 %v74
  %v871 = vpop.f32.mrf.mxu0
  %v872 = vadd.f32 %v699, %v871
  %v873 = vpop.f32.mrf.mxu0
  %v874 = vadd.f32 %v701, %v873
  %875 = vmatprep.mubr.f32.mxu0 %v82
  %876 = vmatmul.mubr.f32.gmra.mxu0 %v81
  %v877 = vpop.f32.mrf.mxu0
  %v878 = vadd.f32 %v705, %v877
  %v879 = vpop.f32.mrf.mxu0
  %v880 = vadd.f32 %v707, %v879
  %881 = vmatprep.mubr.f32.mxu0 %v89
  %882 = vmatmul.mubr.f32.gmra.mxu0 %v88
  %v883 = vpop.f32.mrf.mxu0
  %v884 = vadd.f32 %v711, %v883
  %v885 = vpop.f32.mrf.mxu0
  %v886 = vadd.f32 %v713, %v885
  %887 = vmatprep.mubr.f32.mxu0 %v96
  %888 = vmatmul.mubr.f32.gmra.mxu0 %v95
  %v889 = vpop.f32.mrf.mxu0
  %v890 = vadd.f32 %v717, %v889
  %v891 = vpop.f32.mrf.mxu0
  %v892 = vadd.f32 %v719, %v891
  %893 = vmatprep.mubr.f32.mxu0 %v103
  %894 = vmatmul.mubr.f32.gmra.mxu0 %v102
  %v895 = vpop.f32.mrf.mxu0
  %v896 = vadd.f32 %v723, %v895
  %v897 = vpop.f32.mrf.mxu0
  %v898 = vadd.f32 %v725, %v897
  %899 = vmatprep.mubr.f32.mxu0 %v110
  %900 = vmatmul.mubr.f32.gmra.mxu0 %v109
  %v901 = vpop.f32.mrf.mxu0
  %v902 = vadd.f32 %v729, %v901
  %v903 = vpop.f32.mrf.mxu0
  %v904 = vadd.f32 %v731, %v903
  %905 = vmatprep.mubr.f32.mxu0 %v117
  %906 = vmatmul.mubr.f32.gmra.mxu0 %v116
  %v907 = vpop.f32.mrf.mxu0
  %v908 = vadd.f32 %v735, %v907
  %v909 = vpop.f32.mrf.mxu0
  %v910 = vadd.f32 %v737, %v909
  %911 = vmatprep.mubr.f32.mxu0 %v124
  %912 = vmatmul.mubr.f32.gmra.mxu0 %v123
  %v913 = vpop.f32.mrf.mxu0
  %v914 = vadd.f32 %v741, %v913
  %v915 = vpop.f32.mrf.mxu0
  %v916 = vadd.f32 %v743, %v915
  %917 = vmatprep.mubr.f32.mxu0 %v131
  %918 = vmatmul.mubr.f32.gmra.mxu0 %v130
  %v919 = vpop.f32.mrf.mxu0
  %v920 = vadd.f32 %v747, %v919
  %v921 = vpop.f32.mrf.mxu0
  %v922 = vadd.f32 %v749, %v921
  %923 = vmatprep.mubr.f32.mxu0 %v138
  %924 = vmatmul.mubr.f32.gmra.mxu0 %v137
  %v925 = vpop.f32.mrf.mxu0
  %v926 = vadd.f32 %v753, %v925
  %v927 = vpop.f32.mrf.mxu0
  %v928 = vadd.f32 %v755, %v927
  %929 = vdwg.mxu0
  %930 = vmatprep.subr.mxu0 0.0
  %931 = vmatpush1.msra.mxu0 0.0
  %932 = vmatprep.subr.mxu0 0.0
  %933 = vmatpush1.msra.mxu0 0.0
  %934 = vmatprep.subr.mxu0 0.0
  %935 = vmatpush1.msra.mxu0 0.0
  %936 = vmatprep.subr.mxu0 0.0
  %937 = vmatpush1.msra.mxu0 0.0
  %938 = vmatprep.subr.mxu0 %v355
  %939 = vmatpush1.msra.mxu0 %v354
  %940 = vmatprep.subr.mxu0 %v353
  %941 = vmatpush1.msra.mxu0 %v352
  %942 = vmatprep.subr.mxu0 %v351
  %943 = vmatpush1.msra.mxu0 %v350
  %944 = vmatprep.subr.mxu0 %v349
  %945 = vmatpush1.msra.mxu0 %v348
  %946 = vmatprep.subr.mxu0 %v347
  %947 = vmatpush1.msra.mxu0 %v346
  %948 = vmatprep.subr.mxu0 %v345
  %949 = vmatpush1.msra.mxu0 %v344
  %950 = vmatprep.subr.mxu0 %v343
  %951 = vmatpush1.msra.mxu0 %v342
  %952 = vmatprep.subr.mxu0 %v341
  %953 = vmatpush1.msra.mxu0 %v340
  %954 = vmatprep.subr.mxu0 %v339
  %955 = vmatpush1.msra.mxu0 %v338
  %956 = vmatprep.subr.mxu0 %v337
  %957 = vmatpush1.msra.mxu0 %v336
  %958 = vmatprep.subr.mxu0 %v335
  %959 = vmatpush1.msra.mxu0 %v334
  %960 = vmatprep.subr.mxu0 %v333
  %961 = vmatpush1.msra.mxu0 %v332
  %962 = vmatprep.subr.mxu0 0.0
  %963 = vmatpush2.msra.mxu0 0.0
  %964 = vmatprep.subr.mxu0 0.0
  %965 = vmatpush2.msra.mxu0 0.0
  %966 = vmatprep.subr.mxu0 0.0
  %967 = vmatpush2.msra.mxu0 0.0
  %968 = vmatprep.subr.mxu0 0.0
  %969 = vmatpush2.msra.mxu0 0.0
  %970 = vmatprep.subr.mxu0 0.0
  %971 = vmatpush2.msra.mxu0 0.0
  %972 = vmatprep.subr.mxu0 0.0
  %973 = vmatpush2.msra.mxu0 0.0
  %974 = vmatprep.subr.mxu0 0.0
  %975 = vmatpush2.msra.mxu0 0.0
  %976 = vmatprep.subr.mxu0 0.0
  %977 = vmatpush2.msra.mxu0 0.0
  %978 = vmatprep.subr.mxu0 0.0
  %979 = vmatpush2.msra.mxu0 0.0
  %980 = vmatprep.subr.mxu0 0.0
  %981 = vmatpush2.msra.mxu0 0.0
  %982 = vmatprep.subr.mxu0 0.0
  %983 = vmatpush2.msra.mxu0 0.0
  %984 = vmatprep.subr.mxu0 0.0
  %985 = vmatpush2.msra.mxu0 0.0
  %986 = vmatprep.subr.mxu0 0.0
  %987 = vmatpush2.msra.mxu0 0.0
  %988 = vmatprep.subr.mxu0 0.0
  %989 = vmatpush2.msra.mxu0 0.0
  %990 = vmatprep.subr.mxu0 0.0
  %991 = vmatpush2.msra.mxu0 0.0
  %992 = vmatprep.subr.mxu0 0.0
  %993 = vmatpush2.msra.mxu0 0.0
  %994 = vmatprep.mubr.f32.mxu0 0.0
  %995 = vmatmul.mubr.f32.gmra.mxu0 %v358
  %v996 = vpop.f32.mrf.mxu0
  %v997 = vadd.f32 %v824, %v996
  %v998 = vpop.f32.mrf.mxu0
  %v999 = vadd.f32 %v826, %v998
  %1000 = vmatprep.mubr.f32.mxu0 0.0
  %1001 = vmatmul.mubr.f32.gmra.mxu0 %v361
  %v1002 = vpop.f32.mrf.mxu0
  %v1003 = vadd.f32 %v830, %v1002
  %v1004 = vpop.f32.mrf.mxu0
  %v1005 = vadd.f32 %v832, %v1004
  %1006 = vmatprep.mubr.f32.mxu0 0.0
  %1007 = vmatmul.mubr.f32.gmra.mxu0 %v364
  %v1008 = vpop.f32.mrf.mxu0
  %v1009 = vadd.f32 %v836, %v1008
  %v1010 = vpop.f32.mrf.mxu0
  %v1011 = vadd.f32 %v838, %v1010
  %1012 = vmatprep.mubr.f32.mxu0 0.0
  %1013 = vmatmul.mubr.f32.gmra.mxu0 %v367
  %v1014 = vpop.f32.mrf.mxu0
  %v1015 = vadd.f32 %v842, %v1014
  %v1016 = vpop.f32.mrf.mxu0
  %v1017 = vadd.f32 %v844, %v1016
  %1018 = vmatprep.mubr.f32.mxu0 0.0
  %1019 = vmatmul.mubr.f32.gmra.mxu0 %v370
  %v1020 = vpop.f32.mrf.mxu0
  %v1021 = vadd.f32 %v848, %v1020
  %v1022 = vpop.f32.mrf.mxu0
  %v1023 = vadd.f32 %v850, %v1022
  %1024 = vmatprep.mubr.f32.mxu0 0.0
  %1025 = vmatmul.mubr.f32.gmra.mxu0 %v373
  %v1026 = vpop.f32.mrf.mxu0
  %v1027 = vadd.f32 %v854, %v1026
  %v1028 = vpop.f32.mrf.mxu0
  %v1029 = vadd.f32 %v856, %v1028
  %1030 = vmatprep.mubr.f32.mxu0 0.0
  %1031 = vmatmul.mubr.f32.gmra.mxu0 %v376
  %v1032 = vpop.f32.mrf.mxu0
  %v1033 = vadd.f32 %v860, %v1032
  %v1034 = vpop.f32.mrf.mxu0
  %v1035 = vadd.f32 %v862, %v1034
  %1036 = vmatprep.mubr.f32.mxu0 0.0
  %1037 = vmatmul.mubr.f32.gmra.mxu0 %v379
  %v1038 = vpop.f32.mrf.mxu0
  %v1039 = vadd.f32 %v866, %v1038
  %v1040 = vpop.f32.mrf.mxu0
  %v1041 = vadd.f32 %v868, %v1040
  %1042 = vmatprep.mubr.f32.mxu0 0.0
  %1043 = vmatmul.mubr.f32.gmra.mxu0 %v382
  %v1044 = vpop.f32.mrf.mxu0
  %v1045 = vadd.f32 %v872, %v1044
  %v1046 = vpop.f32.mrf.mxu0
  %v1047 = vadd.f32 %v874, %v1046
  %1048 = vmatprep.mubr.f32.mxu0 0.0
  %1049 = vmatmul.mubr.f32.gmra.mxu0 %v385
  %v1050 = vpop.f32.mrf.mxu0
  %v1051 = vadd.f32 %v878, %v1050
  %v1052 = vpop.f32.mrf.mxu0
  %v1053 = vadd.f32 %v880, %v1052
  %1054 = vmatprep.mubr.f32.mxu0 0.0
  %1055 = vmatmul.mubr.f32.gmra.mxu0 %v388
  %v1056 = vpop.f32.mrf.mxu0
  %v1057 = vadd.f32 %v884, %v1056
  %v1058 = vpop.f32.mrf.mxu0
  %v1059 = vadd.f32 %v886, %v1058
  %1060 = vmatprep.mubr.f32.mxu0 0.0
  %1061 = vmatmul.mubr.f32.gmra.mxu0 %v391
  %v1062 = vpop.f32.mrf.mxu0
  %v1063 = vadd.f32 %v890, %v1062
  %v1064 = vpop.f32.mrf.mxu0
  %v1065 = vadd.f32 %v892, %v1064
  %1066 = vmatprep.mubr.f32.mxu0 0.0
  %1067 = vmatmul.mubr.f32.gmra.mxu0 %v394
  %v1068 = vpop.f32.mrf.mxu0
  %v1069 = vadd.f32 %v896, %v1068
  %v1070 = vpop.f32.mrf.mxu0
  %v1071 = vadd.f32 %v898, %v1070
  %1072 = vmatprep.mubr.f32.mxu0 0.0
  %1073 = vmatmul.mubr.f32.gmra.mxu0 %v397
  %v1074 = vpop.f32.mrf.mxu0
  %v1075 = vadd.f32 %v902, %v1074
  %v1076 = vpop.f32.mrf.mxu0
  %v1077 = vadd.f32 %v904, %v1076
  %1078 = vmatprep.mubr.f32.mxu0 0.0
  %1079 = vmatmul.mubr.f32.gmra.mxu0 %v400
  %v1080 = vpop.f32.mrf.mxu0
  %v1081 = vadd.f32 %v908, %v1080
  %v1082 = vpop.f32.mrf.mxu0
  %v1083 = vadd.f32 %v910, %v1082
  %1084 = vmatprep.mubr.f32.mxu0 0.0
  %1085 = vmatmul.mubr.f32.gmra.mxu0 %v403
  %v1086 = vpop.f32.mrf.mxu0
  %v1087 = vadd.f32 %v914, %v1086
  %v1088 = vpop.f32.mrf.mxu0
  %v1089 = vadd.f32 %v916, %v1088
  %1090 = vmatprep.mubr.f32.mxu0 0.0
  %1091 = vmatmul.mubr.f32.gmra.mxu0 %v406
  %v1092 = vpop.f32.mrf.mxu0
  %v1093 = vadd.f32 %v920, %v1092
  %v1094 = vpop.f32.mrf.mxu0
  %v1095 = vadd.f32 %v922, %v1094
  %1096 = vmatprep.mubr.f32.mxu0 0.0
  %1097 = vmatmul.mubr.f32.gmra.mxu0 %v409
  %v1098 = vpop.f32.mrf.mxu0
  %v1099 = vadd.f32 %v926, %v1098
  %v1100 = vpop.f32.mrf.mxu0
  %v1101 = vadd.f32 %v928, %v1100
  %1102 = vdwg.mxu0
  %vm1103 = vcmask 556032
  %v1104 = vsel %vm1103, %v999, 0.0
  %v1105 = vadd.f32 %v997, %v1104
  %1106 = vadd.xlane.f32.xlu0 %v1105
  %v1107 = vpop.xlane.xlu0 %1106
  %v1108 = vsel %vm1103, %v1005, 0.0
  %v1109 = vadd.f32 %v1003, %v1108
  %1110 = vadd.xlane.f32.xlu0 %v1109
  %v1111 = vpop.xlane.xlu0 %1110
  %v1112 = vsel %vm1103, %v1011, 0.0
  %v1113 = vadd.f32 %v1009, %v1112
  %1114 = vadd.xlane.f32.xlu0 %v1113
  %v1115 = vpop.xlane.xlu0 %1114
  %v1116 = vsel %vm1103, %v1017, 0.0
  %v1117 = vadd.f32 %v1015, %v1116
  %1118 = vadd.xlane.f32.xlu0 %v1117
  %v1119 = vpop.xlane.xlu0 %1118
  %v1120 = vsel %vm1103, %v1023, 0.0
  %v1121 = vadd.f32 %v1021, %v1120
  %1122 = vadd.xlane.f32.xlu0 %v1121
  %v1123 = vpop.xlane.xlu0 %1122
  %v1124 = vsel %vm1103, %v1029, 0.0
  %v1125 = vadd.f32 %v1027, %v1124
  %1126 = vadd.xlane.f32.xlu0 %v1125
  %v1127 = vpop.xlane.xlu0 %1126
  %v1128 = vsel %vm1103, %v1035, 0.0
  %v1129 = vadd.f32 %v1033, %v1128
  %1130 = vadd.xlane.f32.xlu0 %v1129
  %v1131 = vpop.xlane.xlu0 %1130
  %v1132 = vsel %vm1103, %v1041, 0.0
  %v1133 = vadd.f32 %v1039, %v1132
  %1134 = vadd.xlane.f32.xlu0 %v1133
  %v1135 = vpop.xlane.xlu0 %1134
  %v1136 = vsel %vm1103, %v1047, 0.0
  %v1137 = vadd.f32 %v1045, %v1136
  %1138 = vadd.xlane.f32.xlu0 %v1137
  %v1139 = vpop.xlane.xlu0 %1138
  %v1140 = vsel %vm1103, %v1053, 0.0
  %v1141 = vadd.f32 %v1051, %v1140
  %1142 = vadd.xlane.f32.xlu0 %v1141
  %v1143 = vpop.xlane.xlu0 %1142
  %v1144 = vsel %vm1103, %v1059, 0.0
  %v1145 = vadd.f32 %v1057, %v1144
  %1146 = vadd.xlane.f32.xlu0 %v1145
  %v1147 = vpop.xlane.xlu0 %1146
  %v1148 = vsel %vm1103, %v1065, 0.0
  %v1149 = vadd.f32 %v1063, %v1148
  %1150 = vadd.xlane.f32.xlu0 %v1149
  %v1151 = vpop.xlane.xlu0 %1150
  %v1152 = vsel %vm1103, %v1071, 0.0
  %v1153 = vadd.f32 %v1069, %v1152
  %1154 = vadd.xlane.f32.xlu0 %v1153
  %v1155 = vpop.xlane.xlu0 %1154
  %v1156 = vsel %vm1103, %v1077, 0.0
  %v1157 = vadd.f32 %v1075, %v1156
  %1158 = vadd.xlane.f32.xlu0 %v1157
  %v1159 = vpop.xlane.xlu0 %1158
  %v1160 = vsel %vm1103, %v1083, 0.0
  %v1161 = vadd.f32 %v1081, %v1160
  %1162 = vadd.xlane.f32.xlu0 %v1161
  %v1163 = vpop.xlane.xlu0 %1162
  %v1164 = vsel %vm1103, %v1089, 0.0
  %v1165 = vadd.f32 %v1087, %v1164
  %1166 = vadd.xlane.f32.xlu0 %v1165
  %v1167 = vpop.xlane.xlu0 %1166
  %v1168 = vsel %vm1103, %v1095, 0.0
  %v1169 = vadd.f32 %v1093, %v1168
  %1170 = vadd.xlane.f32.xlu0 %v1169
  %v1171 = vpop.xlane.xlu0 %1170
  %v1172 = vsel %vm1103, %v1101, 0.0
  %v1173 = vadd.f32 %v1099, %v1172
  %1174 = vadd.xlane.f32.xlu0 %v1173
  %v1175 = vpop.xlane.xlu0 %1174
  %v1176 = vmul.f32 %v997, %v997
  %v1177 = vmul.f32 %v999, %v999
  %v1178 = vmul.f32 %v1003, %v1003
  %v1179 = vmul.f32 %v1005, %v1005
  %v1180 = vmul.f32 %v1009, %v1009
  %v1181 = vmul.f32 %v1011, %v1011
  %v1182 = vmul.f32 %v1015, %v1015
  %v1183 = vmul.f32 %v1017, %v1017
  %v1184 = vmul.f32 %v1021, %v1021
  %v1185 = vmul.f32 %v1023, %v1023
  %v1186 = vmul.f32 %v1027, %v1027
  %v1187 = vmul.f32 %v1029, %v1029
  %v1188 = vmul.f32 %v1033, %v1033
  %v1189 = vmul.f32 %v1035, %v1035
  %v1190 = vmul.f32 %v1039, %v1039
  %v1191 = vmul.f32 %v1041, %v1041
  %v1192 = vmul.f32 %v1045, %v1045
  %v1193 = vmul.f32 %v1047, %v1047
  %v1194 = vmul.f32 %v1051, %v1051
  %v1195 = vmul.f32 %v1053, %v1053
  %v1196 = vmul.f32 %v1057, %v1057
  %v1197 = vmul.f32 %v1059, %v1059
  %v1198 = vmul.f32 %v1063, %v1063
  %v1199 = vmul.f32 %v1065, %v1065
  %v1200 = vmul.f32 %v1069, %v1069
  %v1201 = vmul.f32 %v1071, %v1071
  %v1202 = vmul.f32 %v1075, %v1075
  %v1203 = vmul.f32 %v1077, %v1077
  %v1204 = vmul.f32 %v1081, %v1081
  %v1205 = vmul.f32 %v1083, %v1083
  %v1206 = vmul.f32 %v1087, %v1087
  %v1207 = vmul.f32 %v1089, %v1089
  %v1208 = vmul.f32 %v1093, %v1093
  %v1209 = vmul.f32 %v1095, %v1095
  %v1210 = vmul.f32 %v1099, %v1099
  %v1211 = vmul.f32 %v1101, %v1101
  %v1212 = vsel %vm1103, %v1177, 0.0
  %v1213 = vadd.f32 %v1176, %v1212
  %1214 = vadd.xlane.f32.xlu0 %v1213
  %v1215 = vpop.xlane.xlu0 %1214
  %v1216 = vsel %vm1103, %v1179, 0.0
  %v1217 = vadd.f32 %v1178, %v1216
  %1218 = vadd.xlane.f32.xlu0 %v1217
  %v1219 = vpop.xlane.xlu0 %1218
  %v1220 = vsel %vm1103, %v1181, 0.0
  %v1221 = vadd.f32 %v1180, %v1220
  %1222 = vadd.xlane.f32.xlu0 %v1221
  %v1223 = vpop.xlane.xlu0 %1222
  %v1224 = vsel %vm1103, %v1183, 0.0
  %v1225 = vadd.f32 %v1182, %v1224
  %1226 = vadd.xlane.f32.xlu0 %v1225
  %v1227 = vpop.xlane.xlu0 %1226
  %v1228 = vsel %vm1103, %v1185, 0.0
  %v1229 = vadd.f32 %v1184, %v1228
  %1230 = vadd.xlane.f32.xlu0 %v1229
  %v1231 = vpop.xlane.xlu0 %1230
  %v1232 = vsel %vm1103, %v1187, 0.0
  %v1233 = vadd.f32 %v1186, %v1232
  %1234 = vadd.xlane.f32.xlu0 %v1233
  %v1235 = vpop.xlane.xlu0 %1234
  %v1236 = vsel %vm1103, %v1189, 0.0
  %v1237 = vadd.f32 %v1188, %v1236
  %1238 = vadd.xlane.f32.xlu0 %v1237
  %v1239 = vpop.xlane.xlu0 %1238
  %v1240 = vsel %vm1103, %v1191, 0.0
  %v1241 = vadd.f32 %v1190, %v1240
  %1242 = vadd.xlane.f32.xlu0 %v1241
  %v1243 = vpop.xlane.xlu0 %1242
  %v1244 = vsel %vm1103, %v1193, 0.0
  %v1245 = vadd.f32 %v1192, %v1244
  %1246 = vadd.xlane.f32.xlu0 %v1245
  %v1247 = vpop.xlane.xlu0 %1246
  %v1248 = vsel %vm1103, %v1195, 0.0
  %v1249 = vadd.f32 %v1194, %v1248
  %1250 = vadd.xlane.f32.xlu0 %v1249
  %v1251 = vpop.xlane.xlu0 %1250
  %v1252 = vsel %vm1103, %v1197, 0.0
  %v1253 = vadd.f32 %v1196, %v1252
  %1254 = vadd.xlane.f32.xlu0 %v1253
  %v1255 = vpop.xlane.xlu0 %1254
  %v1256 = vsel %vm1103, %v1199, 0.0
  %v1257 = vadd.f32 %v1198, %v1256
  %1258 = vadd.xlane.f32.xlu0 %v1257
  %v1259 = vpop.xlane.xlu0 %1258
  %v1260 = vsel %vm1103, %v1201, 0.0
  %v1261 = vadd.f32 %v1200, %v1260
  %1262 = vadd.xlane.f32.xlu0 %v1261
  %v1263 = vpop.xlane.xlu0 %1262
  %v1264 = vsel %vm1103, %v1203, 0.0
  %v1265 = vadd.f32 %v1202, %v1264
  %1266 = vadd.xlane.f32.xlu0 %v1265
  %v1267 = vpop.xlane.xlu0 %1266
  %v1268 = vsel %vm1103, %v1205, 0.0
  %v1269 = vadd.f32 %v1204, %v1268
  %1270 = vadd.xlane.f32.xlu0 %v1269
  %v1271 = vpop.xlane.xlu0 %1270
  %v1272 = vsel %vm1103, %v1207, 0.0
  %v1273 = vadd.f32 %v1206, %v1272
  %1274 = vadd.xlane.f32.xlu0 %v1273
  %v1275 = vpop.xlane.xlu0 %1274
  %v1276 = vsel %vm1103, %v1209, 0.0
  %v1277 = vadd.f32 %v1208, %v1276
  %1278 = vadd.xlane.f32.xlu0 %v1277
  %v1279 = vpop.xlane.xlu0 %1278
  %v1280 = vsel %vm1103, %v1211, 0.0
  %v1281 = vadd.f32 %v1210, %v1280
  %1282 = vadd.xlane.f32.xlu0 %v1281
  %v1283 = vpop.xlane.xlu0 %1282
  %v1284 = vmul.f32 %v1107, 0.0051020407
  %v1285 = vmul.f32 %v1111, 0.0051020407
  %v1286 = vmul.f32 %v1115, 0.0051020407
  %v1287 = vmul.f32 %v1119, 0.0051020407
  %v1288 = vmul.f32 %v1123, 0.0051020407
  %v1289 = vmul.f32 %v1127, 0.0051020407
  %v1290 = vmul.f32 %v1131, 0.0051020407
  %v1291 = vmul.f32 %v1135, 0.0051020407
  %v1292 = vmul.f32 %v1139, 0.0051020407
  %v1293 = vmul.f32 %v1143, 0.0051020407
  %v1294 = vmul.f32 %v1147, 0.0051020407
  %v1295 = vmul.f32 %v1151, 0.0051020407
  %v1296 = vmul.f32 %v1155, 0.0051020407
  %v1297 = vmul.f32 %v1159, 0.0051020407
  %v1298 = vmul.f32 %v1163, 0.0051020407
  %v1299 = vmul.f32 %v1167, 0.0051020407
  %v1300 = vmul.f32 %v1171, 0.0051020407
  %v1301 = vmul.f32 %v1175, 0.0051020407
  %v1302 = vmul.f32 %v1215, 0.0051020407
  %v1303 = vmul.f32 %v1219, 0.0051020407
  %v1304 = vmul.f32 %v1223, 0.0051020407
  %v1305 = vmul.f32 %v1227, 0.0051020407
  %v1306 = vmul.f32 %v1231, 0.0051020407
  %v1307 = vmul.f32 %v1235, 0.0051020407
  %v1308 = vmul.f32 %v1239, 0.0051020407
  %v1309 = vmul.f32 %v1243, 0.0051020407
  %v1310 = vmul.f32 %v1247, 0.0051020407
  %v1311 = vmul.f32 %v1251, 0.0051020407
  %v1312 = vmul.f32 %v1255, 0.0051020407
  %v1313 = vmul.f32 %v1259, 0.0051020407
  %v1314 = vmul.f32 %v1263, 0.0051020407
  %v1315 = vmul.f32 %v1267, 0.0051020407
  %v1316 = vmul.f32 %v1271, 0.0051020407
  %v1317 = vmul.f32 %v1275, 0.0051020407
  %v1318 = vmul.f32 %v1279, 0.0051020407
  %v1319 = vmul.f32 %v1283, 0.0051020407
  %v1320 = vmul.f32 %v1284, %v1284
  %v1321 = vmul.f32 %v1285, %v1285
  %v1322 = vmul.f32 %v1286, %v1286
  %v1323 = vmul.f32 %v1287, %v1287
  %v1324 = vmul.f32 %v1288, %v1288
  %v1325 = vmul.f32 %v1289, %v1289
  %v1326 = vmul.f32 %v1290, %v1290
  %v1327 = vmul.f32 %v1291, %v1291
  %v1328 = vmul.f32 %v1292, %v1292
  %v1329 = vmul.f32 %v1293, %v1293
  %v1330 = vmul.f32 %v1294, %v1294
  %v1331 = vmul.f32 %v1295, %v1295
  %v1332 = vmul.f32 %v1296, %v1296
  %v1333 = vmul.f32 %v1297, %v1297
  %v1334 = vmul.f32 %v1298, %v1298
  %v1335 = vmul.f32 %v1299, %v1299
  %v1336 = vmul.f32 %v1300, %v1300
  %v1337 = vmul.f32 %v1301, %v1301
  %v1338 = vsub.f32 %v1302, %v1320
  %v1339 = vsub.f32 %v1303, %v1321
  %v1340 = vsub.f32 %v1304, %v1322
  %v1341 = vsub.f32 %v1305, %v1323
  %v1342 = vsub.f32 %v1306, %v1324
  %v1343 = vsub.f32 %v1307, %v1325
  %v1344 = vsub.f32 %v1308, %v1326
  %v1345 = vsub.f32 %v1309, %v1327
  %v1346 = vsub.f32 %v1310, %v1328
  %v1347 = vsub.f32 %v1311, %v1329
  %v1348 = vsub.f32 %v1312, %v1330
  %v1349 = vsub.f32 %v1313, %v1331
  %v1350 = vsub.f32 %v1314, %v1332
  %v1351 = vsub.f32 %v1315, %v1333
  %v1352 = vsub.f32 %v1316, %v1334
  %v1353 = vsub.f32 %v1317, %v1335
  %v1354 = vsub.f32 %v1318, %v1336
  %v1355 = vsub.f32 %v1319, %v1337
  %v1356 = vmax.f32 %v1338, 0.0
  %v1357 = vmax.f32 %v1339, 0.0
  %v1358 = vmax.f32 %v1340, 0.0
  %v1359 = vmax.f32 %v1341, 0.0
  %v1360 = vmax.f32 %v1342, 0.0
  %v1361 = vmax.f32 %v1343, 0.0
  %v1362 = vmax.f32 %v1344, 0.0
  %v1363 = vmax.f32 %v1345, 0.0
  %v1364 = vmax.f32 %v1346, 0.0
  %v1365 = vmax.f32 %v1347, 0.0
  %v1366 = vmax.f32 %v1348, 0.0
  %v1367 = vmax.f32 %v1349, 0.0
  %v1368 = vmax.f32 %v1350, 0.0
  %v1369 = vmax.f32 %v1351, 0.0
  %v1370 = vmax.f32 %v1352, 0.0
  %v1371 = vmax.f32 %v1353, 0.0
  %v1372 = vmax.f32 %v1354, 0.0
  %v1373 = vmax.f32 %v1355, 0.0
  %v1374 = vld [vmem:[%s2] sm:$0xff]
  %v1375 = vld [vmem:[%s2 + $0x8] sm:$0xff]
  %v1376 = vld [vmem:[%s2 + $0x10] sm:$0xff]
  %v1377 = vld [vmem:[%s2 + $0x18] sm:$0xff]
  %v1378 = vld [vmem:[%s2 + $0x20] sm:$0xff]
  %v1379 = vld [vmem:[%s2 + $0x28] sm:$0xff]
  %v1380 = vld [vmem:[%s2 + $0x30] sm:$0xff]
  %v1381 = vld [vmem:[%s2 + $0x38] sm:$0xff]
  %v1382 = vld [vmem:[%s2 + $0x40] sm:$0xff]
  %v1383 = vld [vmem:[%s2 + $0x48] sm:$0xff]
  %v1384 = vld [vmem:[%s2 + $0x50] sm:$0xff]
  %v1385 = vld [vmem:[%s2 + $0x58] sm:$0xff]
  %v1386 = vld [vmem:[%s2 + $0x60] sm:$0xff]
  %v1387 = vld [vmem:[%s2 + $0x68] sm:$0xff]
  %v1388 = vld [vmem:[%s2 + $0x70] sm:$0xff]
  %v1389 = vld [vmem:[%s2 + $0x78] sm:$0xff]
  %v1390 = vld [vmem:[%s2 + $0x80] sm:$0xff]
  %v1391 = vld [vmem:[%s2 + $0x88] sm:$0xff]
  %v1392 = vadd.f32 %v1356, 0.001
  %v1393 = vadd.f32 %v1357, 0.001
  %v1394 = vadd.f32 %v1358, 0.001
  %v1395 = vadd.f32 %v1359, 0.001
  %v1396 = vadd.f32 %v1360, 0.001
  %v1397 = vadd.f32 %v1361, 0.001
  %v1398 = vadd.f32 %v1362, 0.001
  %v1399 = vadd.f32 %v1363, 0.001
  %v1400 = vadd.f32 %v1364, 0.001
  %v1401 = vadd.f32 %v1365, 0.001
  %v1402 = vadd.f32 %v1366, 0.001
  %v1403 = vadd.f32 %v1367, 0.001
  %v1404 = vadd.f32 %v1368, 0.001
  %v1405 = vadd.f32 %v1369, 0.001
  %v1406 = vadd.f32 %v1370, 0.001
  %v1407 = vadd.f32 %v1371, 0.001
  %v1408 = vadd.f32 %v1372, 0.001
  %v1409 = vadd.f32 %v1373, 0.001
  %v1410 = vrsqrt.pop %v1392
  %v1411 = vrsqrt.pop %v1393
  %v1412 = vrsqrt.pop %v1394
  %v1413 = vrsqrt.pop %v1395
  %v1414 = vrsqrt.pop %v1396
  %v1415 = vrsqrt.pop %v1397
  %v1416 = vrsqrt.pop %v1398
  %v1417 = vrsqrt.pop %v1399
  %v1418 = vrsqrt.pop %v1400
  %v1419 = vrsqrt.pop %v1401
  %v1420 = vrsqrt.pop %v1402
  %v1421 = vrsqrt.pop %v1403
  %v1422 = vrsqrt.pop %v1404
  %v1423 = vrsqrt.pop %v1405
  %v1424 = vrsqrt.pop %v1406
  %v1425 = vrsqrt.pop %v1407
  %v1426 = vrsqrt.pop %v1408
  %v1427 = vrsqrt.pop %v1409
  %v1428 = vmul.f32 %v1410, %v1374
  %v1429 = vmul.f32 %v1411, %v1375
  %v1430 = vmul.f32 %v1412, %v1376
  %v1431 = vmul.f32 %v1413, %v1377
  %v1432 = vmul.f32 %v1414, %v1378
  %v1433 = vmul.f32 %v1415, %v1379
  %v1434 = vmul.f32 %v1416, %v1380
  %v1435 = vmul.f32 %v1417, %v1381
  %v1436 = vmul.f32 %v1418, %v1382
  %v1437 = vmul.f32 %v1419, %v1383
  %v1438 = vmul.f32 %v1420, %v1384
  %v1439 = vmul.f32 %v1421, %v1385
  %v1440 = vmul.f32 %v1422, %v1386
  %v1441 = vmul.f32 %v1423, %v1387
  %v1442 = vmul.f32 %v1424, %v1388
  %v1443 = vmul.f32 %v1425, %v1389
  %v1444 = vmul.f32 %v1426, %v1390
  %v1445 = vmul.f32 %v1427, %v1391
  %v1446 = vmul.f32 %v1284, %v1428
  %v1447 = vmul.f32 %v1285, %v1429
  %v1448 = vmul.f32 %v1286, %v1430
  %v1449 = vmul.f32 %v1287, %v1431
  %v1450 = vmul.f32 %v1288, %v1432
  %v1451 = vmul.f32 %v1289, %v1433
  %v1452 = vmul.f32 %v1290, %v1434
  %v1453 = vmul.f32 %v1291, %v1435
  %v1454 = vmul.f32 %v1292, %v1436
  %v1455 = vmul.f32 %v1293, %v1437
  %v1456 = vmul.f32 %v1294, %v1438
  %v1457 = vmul.f32 %v1295, %v1439
  %v1458 = vmul.f32 %v1296, %v1440
  %v1459 = vmul.f32 %v1297, %v1441
  %v1460 = vmul.f32 %v1298, %v1442
  %v1461 = vmul.f32 %v1299, %v1443
  %v1462 = vmul.f32 %v1300, %v1444
  %v1463 = vmul.f32 %v1301, %v1445
  %1482 = vrot.lane.b32.xlu0 %v1446, 1
  %v1483 = vpop.permute.xlu0 %1482
  %1484 = vrot.lane.b32.xlu0 %v1447, 1
  %v1485 = vpop.permute.xlu0 %1484
  %1486 = vrot.lane.b32.xlu0 %v1448, 1
  %v1487 = vpop.permute.xlu0 %1486
  %1488 = vrot.lane.b32.xlu0 %v1449, 1
  %v1489 = vpop.permute.xlu0 %1488
  %1490 = vrot.lane.b32.xlu0 %v1450, 1
  %v1491 = vpop.permute.xlu0 %1490
  %1492 = vrot.lane.b32.xlu0 %v1451, 1
  %v1493 = vpop.permute.xlu0 %1492
  %1494 = vrot.lane.b32.xlu0 %v1452, 1
  %v1495 = vpop.permute.xlu0 %1494
  %1496 = vrot.lane.b32.xlu0 %v1453, 1
  %v1497 = vpop.permute.xlu0 %1496
  %1498 = vrot.lane.b32.xlu0 %v1454, 1
  %v1499 = vpop.permute.xlu0 %1498
  %1500 = vrot.lane.b32.xlu0 %v1455, 1
  %v1501 = vpop.permute.xlu0 %1500
  %1502 = vrot.lane.b32.xlu0 %v1456, 1
  %v1503 = vpop.permute.xlu0 %1502
  %1504 = vrot.lane.b32.xlu0 %v1457, 1
  %v1505 = vpop.permute.xlu0 %1504
  %1506 = vrot.lane.b32.xlu0 %v1458, 1
  %v1507 = vpop.permute.xlu0 %1506
  %1508 = vrot.lane.b32.xlu0 %v1459, 1
  %v1509 = vpop.permute.xlu0 %1508
  %1510 = vrot.lane.b32.xlu0 %v1460, 1
  %v1511 = vpop.permute.xlu0 %1510
  %1512 = vrot.lane.b32.xlu0 %v1461, 1
  %v1513 = vpop.permute.xlu0 %1512
  %1514 = vrot.lane.b32.xlu0 %v1462, 1
  %v1515 = vpop.permute.xlu0 %1514
  %1516 = vrot.lane.b32.xlu0 %v1463, 1
  %v1517 = vpop.permute.xlu0 %1516
  %v1536 = vsub.f32 %v1374, %v1483
  %v1537 = vsub.f32 %v1375, %v1485
  %v1538 = vsub.f32 %v1376, %v1487
  %v1539 = vsub.f32 %v1377, %v1489
  %v1540 = vsub.f32 %v1378, %v1491
  %v1541 = vsub.f32 %v1379, %v1493
  %v1542 = vsub.f32 %v1380, %v1495
  %v1543 = vsub.f32 %v1381, %v1497
  %v1544 = vsub.f32 %v1382, %v1499
  %v1545 = vsub.f32 %v1383, %v1501
  %v1546 = vsub.f32 %v1384, %v1503
  %v1547 = vsub.f32 %v1385, %v1505
  %v1548 = vsub.f32 %v1386, %v1507
  %v1549 = vsub.f32 %v1387, %v1509
  %v1550 = vsub.f32 %v1388, %v1511
  %v1551 = vsub.f32 %v1389, %v1513
  %v1552 = vsub.f32 %v1390, %v1515
  %v1553 = vsub.f32 %v1391, %v1517
  %1555 = vset.pattern.permute.xlu0 0
  %1556 = vperm.xlu0 %1555, %v1428
  %v1557 = vpop.permute.xlu0 %1556
  %1560 = vset.pattern.permute.xlu0 0
  %1561 = vperm.xlu0 %1560, %v1429
  %v1562 = vpop.permute.xlu0 %1561
  %1565 = vset.pattern.permute.xlu0 0
  %1566 = vperm.xlu0 %1565, %v1430
  %v1567 = vpop.permute.xlu0 %1566
  %1570 = vset.pattern.permute.xlu0 0
  %1571 = vperm.xlu0 %1570, %v1431
  %v1572 = vpop.permute.xlu0 %1571
  %1575 = vset.pattern.permute.xlu0 0
  %1576 = vperm.xlu0 %1575, %v1432
  %v1577 = vpop.permute.xlu0 %1576
  %1580 = vset.pattern.permute.xlu0 0
  %1581 = vperm.xlu0 %1580, %v1433
  %v1582 = vpop.permute.xlu0 %1581
  %1585 = vset.pattern.permute.xlu0 0
  %1586 = vperm.xlu0 %1585, %v1434
  %v1587 = vpop.permute.xlu0 %1586
  %1590 = vset.pattern.permute.xlu0 0
  %1591 = vperm.xlu0 %1590, %v1435
  %v1592 = vpop.permute.xlu0 %1591
  %1595 = vset.pattern.permute.xlu0 0
  %1596 = vperm.xlu0 %1595, %v1436
  %v1597 = vpop.permute.xlu0 %1596
  %1600 = vset.pattern.permute.xlu0 0
  %1601 = vperm.xlu0 %1600, %v1437
  %v1602 = vpop.permute.xlu0 %1601
  %1605 = vset.pattern.permute.xlu0 0
  %1606 = vperm.xlu0 %1605, %v1438
  %v1607 = vpop.permute.xlu0 %1606
  %1610 = vset.pattern.permute.xlu0 0
  %1611 = vperm.xlu0 %1610, %v1439
  %v1612 = vpop.permute.xlu0 %1611
  %1615 = vset.pattern.permute.xlu0 0
  %1616 = vperm.xlu0 %1615, %v1440
  %v1617 = vpop.permute.xlu0 %1616
  %1620 = vset.pattern.permute.xlu0 0
  %1621 = vperm.xlu0 %1620, %v1441
  %v1622 = vpop.permute.xlu0 %1621
  %1625 = vset.pattern.permute.xlu0 0
  %1626 = vperm.xlu0 %1625, %v1442
  %v1627 = vpop.permute.xlu0 %1626
  %1630 = vset.pattern.permute.xlu0 0
  %1631 = vperm.xlu0 %1630, %v1443
  %v1632 = vpop.permute.xlu0 %1631
  %1635 = vset.pattern.permute.xlu0 0
  %1636 = vperm.xlu0 %1635, %v1444
  %v1637 = vpop.permute.xlu0 %1636
  %1640 = vset.pattern.permute.xlu0 0
  %1641 = vperm.xlu0 %1640, %v1445
  %v1642 = vpop.permute.xlu0 %1641
  %v1644 = vmul.f32 %v997, %v1557
  %v1645 = vmul.f32 %v999, %v1557
  %v1646 = vmul.f32 %v1003, %v1562
  %v1647 = vmul.f32 %v1005, %v1562
  %v1648 = vmul.f32 %v1009, %v1567
  %v1649 = vmul.f32 %v1011, %v1567
  %v1650 = vmul.f32 %v1015, %v1572
  %v1651 = vmul.f32 %v1017, %v1572
  %v1652 = vmul.f32 %v1021, %v1577
  %v1653 = vmul.f32 %v1023, %v1577
  %v1654 = vmul.f32 %v1027, %v1582
  %v1655 = vmul.f32 %v1029, %v1582
  %v1656 = vmul.f32 %v1033, %v1587
  %v1657 = vmul.f32 %v1035, %v1587
  %v1658 = vmul.f32 %v1039, %v1592
  %v1659 = vmul.f32 %v1041, %v1592
  %v1660 = vmul.f32 %v1045, %v1597
  %v1661 = vmul.f32 %v1047, %v1597
  %v1662 = vmul.f32 %v1051, %v1602
  %v1663 = vmul.f32 %v1053, %v1602
  %v1664 = vmul.f32 %v1057, %v1607
  %v1665 = vmul.f32 %v1059, %v1607
  %v1666 = vmul.f32 %v1063, %v1612
  %v1667 = vmul.f32 %v1065, %v1612
  %v1668 = vmul.f32 %v1069, %v1617
  %v1669 = vmul.f32 %v1071, %v1617
  %v1670 = vmul.f32 %v1075, %v1622
  %v1671 = vmul.f32 %v1077, %v1622
  %v1672 = vmul.f32 %v1081, %v1627
  %v1673 = vmul.f32 %v1083, %v1627
  %v1674 = vmul.f32 %v1087, %v1632
  %v1675 = vmul.f32 %v1089, %v1632
  %v1676 = vmul.f32 %v1093, %v1637
  %v1677 = vmul.f32 %v1095, %v1637
  %v1678 = vmul.f32 %v1099, %v1642
  %v1679 = vmul.f32 %v1101, %v1642
  %1681 = vset.pattern.permute.xlu0 1
  %1682 = vperm.xlu0 %1681, %v1536
  %v1683 = vpop.permute.xlu0 %1682
  %1686 = vset.pattern.permute.xlu0 1
  %1687 = vperm.xlu0 %1686, %v1537
  %v1688 = vpop.permute.xlu0 %1687
  %1691 = vset.pattern.permute.xlu0 1
  %1692 = vperm.xlu0 %1691, %v1538
  %v1693 = vpop.permute.xlu0 %1692
  %1696 = vset.pattern.permute.xlu0 1
  %1697 = vperm.xlu0 %1696, %v1539
  %v1698 = vpop.permute.xlu0 %1697
  %1701 = vset.pattern.permute.xlu0 1
  %1702 = vperm.xlu0 %1701, %v1540
  %v1703 = vpop.permute.xlu0 %1702
  %1706 = vset.pattern.permute.xlu0 1
  %1707 = vperm.xlu0 %1706, %v1541
  %v1708 = vpop.permute.xlu0 %1707
  %1711 = vset.pattern.permute.xlu0 1
  %1712 = vperm.xlu0 %1711, %v1542
  %v1713 = vpop.permute.xlu0 %1712
  %1716 = vset.pattern.permute.xlu0 1
  %1717 = vperm.xlu0 %1716, %v1543
  %v1718 = vpop.permute.xlu0 %1717
  %1721 = vset.pattern.permute.xlu0 1
  %1722 = vperm.xlu0 %1721, %v1544
  %v1723 = vpop.permute.xlu0 %1722
  %1726 = vset.pattern.permute.xlu0 1
  %1727 = vperm.xlu0 %1726, %v1545
  %v1728 = vpop.permute.xlu0 %1727
  %1731 = vset.pattern.permute.xlu0 1
  %1732 = vperm.xlu0 %1731, %v1546
  %v1733 = vpop.permute.xlu0 %1732
  %1736 = vset.pattern.permute.xlu0 1
  %1737 = vperm.xlu0 %1736, %v1547
  %v1738 = vpop.permute.xlu0 %1737
  %1741 = vset.pattern.permute.xlu0 1
  %1742 = vperm.xlu0 %1741, %v1548
  %v1743 = vpop.permute.xlu0 %1742
  %1746 = vset.pattern.permute.xlu0 1
  %1747 = vperm.xlu0 %1746, %v1549
  %v1748 = vpop.permute.xlu0 %1747
  %1751 = vset.pattern.permute.xlu0 1
  %1752 = vperm.xlu0 %1751, %v1550
  %v1753 = vpop.permute.xlu0 %1752
  %1756 = vset.pattern.permute.xlu0 1
  %1757 = vperm.xlu0 %1756, %v1551
  %v1758 = vpop.permute.xlu0 %1757
  %1761 = vset.pattern.permute.xlu0 1
  %1762 = vperm.xlu0 %1761, %v1552
  %v1763 = vpop.permute.xlu0 %1762
  %1766 = vset.pattern.permute.xlu0 1
  %1767 = vperm.xlu0 %1766, %v1553
  %v1768 = vpop.permute.xlu0 %1767
  %v1770 = vadd.f32 %v1644, %v1683
  %v1771 = vadd.f32 %v1645, %v1683
  %v1772 = vadd.f32 %v1646, %v1688
  %v1773 = vadd.f32 %v1647, %v1688
  %v1774 = vadd.f32 %v1648, %v1693
  %v1775 = vadd.f32 %v1649, %v1693
  %v1776 = vadd.f32 %v1650, %v1698
  %v1777 = vadd.f32 %v1651, %v1698
  %v1778 = vadd.f32 %v1652, %v1703
  %v1779 = vadd.f32 %v1653, %v1703
  %v1780 = vadd.f32 %v1654, %v1708
  %v1781 = vadd.f32 %v1655, %v1708
  %v1782 = vadd.f32 %v1656, %v1713
  %v1783 = vadd.f32 %v1657, %v1713
  %v1784 = vadd.f32 %v1658, %v1718
  %v1785 = vadd.f32 %v1659, %v1718
  %v1786 = vadd.f32 %v1660, %v1723
  %v1787 = vadd.f32 %v1661, %v1723
  %v1788 = vadd.f32 %v1662, %v1728
  %v1789 = vadd.f32 %v1663, %v1728
  %v1790 = vadd.f32 %v1664, %v1733
  %v1791 = vadd.f32 %v1665, %v1733
  %v1792 = vadd.f32 %v1666, %v1738
  %v1793 = vadd.f32 %v1667, %v1738
  %v1794 = vadd.f32 %v1668, %v1743
  %v1795 = vadd.f32 %v1669, %v1743
  %v1796 = vadd.f32 %v1670, %v1748
  %v1797 = vadd.f32 %v1671, %v1748
  %v1798 = vadd.f32 %v1672, %v1753
  %v1799 = vadd.f32 %v1673, %v1753
  %v1800 = vadd.f32 %v1674, %v1758
  %v1801 = vadd.f32 %v1675, %v1758
  %v1802 = vadd.f32 %v1676, %v1763
  %v1803 = vadd.f32 %v1677, %v1763
  %v1804 = vadd.f32 %v1678, %v1768
  %v1805 = vadd.f32 %v1679, %v1768
  %1806 = vst [vmem:[%s3] sm:$0xff] %v1770
  %1807 = vst.msk [vmem:[%s3 + $0x8] sm:$0xff] %vm1103, %v1771
  %1808 = vst [vmem:[%s3 + $0x10] sm:$0xff] %v1772
  %1809 = vst.msk [vmem:[%s3 + $0x18] sm:$0xff] %vm1103, %v1773
  %1810 = vst [vmem:[%s3 + $0x20] sm:$0xff] %v1774
  %1811 = vst.msk [vmem:[%s3 + $0x28] sm:$0xff] %vm1103, %v1775
  %1812 = vst [vmem:[%s3 + $0x30] sm:$0xff] %v1776
  %1813 = vst.msk [vmem:[%s3 + $0x38] sm:$0xff] %vm1103, %v1777
  %1814 = vst [vmem:[%s3 + $0x40] sm:$0xff] %v1778
  %1815 = vst.msk [vmem:[%s3 + $0x48] sm:$0xff] %vm1103, %v1779
  %1816 = vst [vmem:[%s3 + $0x50] sm:$0xff] %v1780
  %1817 = vst.msk [vmem:[%s3 + $0x58] sm:$0xff] %vm1103, %v1781
  %1818 = vst [vmem:[%s3 + $0x60] sm:$0xff] %v1782
  %1819 = vst.msk [vmem:[%s3 + $0x68] sm:$0xff] %vm1103, %v1783
  %1820 = vst [vmem:[%s3 + $0x70] sm:$0xff] %v1784
  %1821 = vst.msk [vmem:[%s3 + $0x78] sm:$0xff] %vm1103, %v1785
  %1822 = vst [vmem:[%s3 + $0x80] sm:$0xff] %v1786
  %1823 = vst.msk [vmem:[%s3 + $0x88] sm:$0xff] %vm1103, %v1787
  %1824 = vst [vmem:[%s3 + $0x90] sm:$0xff] %v1788
  %1825 = vst.msk [vmem:[%s3 + $0x98] sm:$0xff] %vm1103, %v1789
  %1826 = vst [vmem:[%s3 + $0xa0] sm:$0xff] %v1790
  %1827 = vst.msk [vmem:[%s3 + $0xa8] sm:$0xff] %vm1103, %v1791
  %1828 = vst [vmem:[%s3 + $0xb0] sm:$0xff] %v1792
  %1829 = vst.msk [vmem:[%s3 + $0xb8] sm:$0xff] %vm1103, %v1793
  %1830 = vst [vmem:[%s3 + $0xc0] sm:$0xff] %v1794
  %1831 = vst.msk [vmem:[%s3 + $0xc8] sm:$0xff] %vm1103, %v1795
  %1832 = vst [vmem:[%s3 + $0xd0] sm:$0xff] %v1796
  %1833 = vst.msk [vmem:[%s3 + $0xd8] sm:$0xff] %vm1103, %v1797
  %1834 = vst [vmem:[%s3 + $0xe0] sm:$0xff] %v1798
  %1835 = vst.msk [vmem:[%s3 + $0xe8] sm:$0xff] %vm1103, %v1799
  %1836 = vst [vmem:[%s3 + $0xf0] sm:$0xff] %v1800
  %1837 = vst.msk [vmem:[%s3 + $0xf8] sm:$0xff] %vm1103, %v1801
  %1838 = vst [vmem:[%s3 + $0x100] sm:$0xff] %v1802
  %1839 = vst.msk [vmem:[%s3 + $0x108] sm:$0xff] %vm1103, %v1803
  %1840 = vst [vmem:[%s3 + $0x110] sm:$0xff] %v1804
  %1841 = vst.msk [vmem:[%s3 + $0x118] sm:$0xff] %vm1103, %v1805
  // Predicated region
  $region14: #{conv2d_batchnorm.1} parent=0 // pred_check
    _
  $region15: #{conv2d_batchnorm.1} parent=0 // pred_check_branch
    %1843 = sbr.rel (0) target = $region17
  $region16: #{conv2d_batchnorm.1} parent=0 // pred_region
    _
  $region17: #{conv2d_batchnorm.1} parent=0 // pred_fallthru
    _
  // Predicated region
  $region18: #{conv2d_batchnorm.1} parent=0 // pred_check
    _
  $region19: #{conv2d_batchnorm.1} parent=0 // pred_check_branch
    %1845 = sbr.rel (0) target = $region21
  $region20: #{conv2d_batchnorm.1} parent=0 // pred_region
    _
  $region21: #{conv2d_batchnorm.1} parent=0 // pred_fallthru
    _

</llo_original>
